<compile_context>
chip_gen: v7x
topology: tpu7x:2x2x1
jax: 0.10.0
libtpu: 0.0.40
codegen_flags: <defaults>
</compile_context>

<pallas_src>
import functools

import jax
import jax.numpy as jnp
import numpy as np
from jax import lax
from jax.experimental import pallas as pl
from jax.experimental.pallas import tpu as pltpu

_LANE = 128   # node (lane) padding
_SUB = 16     # channel (sublane / bf16 packing) padding


def _round_up(x, m):
    return (x + m - 1) // m * m


def _pad2d(a, rows, cols):
    r, c = a.shape
    return jnp.pad(a, ((0, rows - r), (0, cols - c)))


def _vmem_cap_bytes():
    """Physical VMEM of the current generation (fallback: v7x's 64 MiB/TC)."""
    try:
        return int(pltpu.get_tpu_info().vmem_capacity_bytes)
    except Exception:  # pragma: no cover - defensive
        return 64 << 20


def _model_kernel(xT_ref, agT_ref, enc_wT_ref, enc_bT_ref, b1T_ref, b2T_ref,
                  dec_wT_ref, dec_bT_ref, outT_ref, *, max_iter):
    """Whole forward pass, transposed layout (channels=sublanes, nodes=lanes)."""
    # --- encoder Linear: h^T = W_enc^T @ x^T + b_enc^T ------------ f32 [Hp, Np]
    hT = jnp.dot(enc_wT_ref[...], xT_ref[...],
                 preferred_element_type=jnp.float32) + enc_bT_ref[...]

    # --- bias module: (beta*B2)^T @ tanh(B1^T @ h^T) --------------- f32 [Hp, Np]
    # beta is pre-folded into B2 on the host, so this IS beta * bias.
    t = jnp.tanh(jnp.dot(b1T_ref[...], hT.astype(jnp.bfloat16),
                         preferred_element_type=jnp.float32))
    bias_scaledT = jnp.dot(b2T_ref[...], t.astype(jnp.bfloat16),
                           preferred_element_type=jnp.float32)

    # --- implicit fixed-point loop ---------------------------------------------
    # z^T_{k+1} = ReLU(z^T_k @ (gamma*A)^T + beta*b^T); gamma pre-folded into A.
    # A_g^T is the loop-invariant RHS (weight-stationary); z carried in bf16.
    a_gT = agT_ref[...]                                 # hoisted, bf16 [Np, Np]

    def body(_, zT):
        prop = jnp.dot(zT, a_gT, preferred_element_type=jnp.float32)
        return jnp.maximum(prop + bias_scaledT, 0.0).astype(jnp.bfloat16)

    zT = lax.fori_loop(0, max_iter, body,
                       jnp.zeros(hT.shape, jnp.bfloat16), unroll=True)

    # --- residual + exact (erf) GELU, matching torch.nn.GELU() -----------------
    zf = zT.astype(jnp.float32)
    geluT = 0.5 * zf * (1.0 + lax.erf(zf * jnp.float32(1.0 / np.sqrt(2.0))))
    hT = hT + geluT

    # --- decoder Linear ----------------------------------------------------------
    outT_ref[...] = (jnp.dot(dec_wT_ref[...], hT.astype(jnp.bfloat16),
                             preferred_element_type=jnp.float32)
                     + dec_bT_ref[...])


def model_forward(x, adj, params, *, max_iter):
    n, in_c = x.shape
    hid = params["enc_w"].shape[1]
    hid2 = params["b1"].shape[1]
    out_c = params["dec_w"].shape[1]

    # Node (lane) dim -> multiple of 128; channel (sublane) dims -> multiple of 16.
    n_p = _round_up(n, _LANE)
    f_p = _round_up(in_c, _SUB)
    h_p = _round_up(hid, _SUB)
    h2_p = _round_up(hid2, _SUB)
    o_p = _round_up(out_c, _SUB)

    # Post-sigmoid gates computed on the host; gamma folded into A, beta into B2.
    beta = jax.nn.sigmoid(params["scalars"][0])
    gamma = jax.nn.sigmoid(params["scalars"][1])

    bf16 = jnp.bfloat16
    xT = _pad2d(x.T, f_p, n_p).astype(bf16)
    # TODO(synk): keep A in f32 (2x VMEM / MXU cost) if bf16 error compounding
    #             over max_iter iterations exceeds the required tolerance.
    agT = _pad2d((gamma * adj).T, n_p, n_p).astype(bf16)
    enc_wT = _pad2d(params["enc_w"].T, h_p, f_p).astype(bf16)
    enc_bT = _pad2d(params["enc_b"].reshape(-1, 1), h_p, 1).astype(jnp.float32)
    b1T = _pad2d(params["b1"].T, h2_p, h_p).astype(bf16)
    b2T = _pad2d((beta * params["b2"]).T, h_p, h2_p).astype(bf16)
    dec_wT = _pad2d(params["dec_w"].T, o_p, h_p).astype(bf16)
    dec_bT = _pad2d(params["dec_b"].reshape(-1, 1), o_p, 1).astype(jnp.float32)

    operands = (xT, agT, enc_wT, enc_bT, b1T, b2T, dec_wT, dec_bT)

    # Generation-aware scoped-VMEM limit: ~1.2x resident (no grid -> no double
    # buffering), clamped to 85% of this chip's physical VMEM (valid on v7x too).
    resident = sum(int(t.size) * t.dtype.itemsize for t in operands)
    resident += o_p * n_p * 4                       # out^T (f32)
    resident += (2 * h_p + h2_p) * n_p * 4          # h^T, beta*b^T, tanh temp (f32)
    resident += h_p * n_p * 2                       # z^T carry (bf16)
    cap = int(0.85 * _vmem_cap_bytes())
    vmem_limit = int(min(max(int(1.2 * resident) + (4 << 20), 16 << 20), cap))

    vmem = pl.BlockSpec(memory_space=pltpu.MemorySpace.VMEM)
    kernel = functools.partial(_model_kernel, max_iter=max_iter)

    outT_padded = pl.pallas_call(
        kernel,
        out_shape=jax.ShapeDtypeStruct((o_p, n_p), jnp.float32),
        in_specs=[vmem] * len(operands),
        out_specs=vmem,
        compiler_params=pltpu.CompilerParams(vmem_limit_bytes=vmem_limit),
    )(*operands)

    # Slice off padded channels / nodes and transpose back to [N, OUT].
    return outT_padded[:out_c, :n].T


def init_params(key, in_channels, hidden_channels, out_channels,
                beta_init, gamma_init):
    ks = jax.random.split(key, 6)

    def glorot(k, fan_in, fan_out):
        lim = np.sqrt(6.0 / (fan_in + fan_out))
        return jax.random.uniform(k, (fan_in, fan_out), jnp.float32, -lim, lim)

    return {
        # stored as [in, out] (transposed vs. torch Linear's [out, in])
        "enc_w": glorot(ks[0], in_channels, hidden_channels),
        "enc_b": jnp.zeros((1, hidden_channels), jnp.float32),
        "b1": glorot(ks[1], hidden_channels, 2 * hidden_channels),
        "b2": glorot(ks[2], 2 * hidden_channels, hidden_channels),
        "dec_w": glorot(ks[3], hidden_channels, out_channels),
        "dec_b": jnp.zeros((1, out_channels), jnp.float32),
        "scalars": jnp.array([beta_init, gamma_init], jnp.float32),
    }


def densify_graph(edge_index, edge_weight, num_nodes):
    """Build dense propagation matrix A[dst, src] = w from COO edge lists."""
    src, dst = edge_index[0], edge_index[1]
    adj = jnp.zeros((num_nodes, num_nodes), jnp.float32)
    return adj.at[dst, src].add(edge_weight)


if __name__ == "__main__":
    # small Planetoid-like problem
    N = 64              # nodes
    IN_C = 16           # input feature dim
    HID = 32            # hidden_channels
    OUT_C = 8           # out_channels (num classes)
    E = 256             # edges
    MAX_ITER = 16
    BETA_INIT, GAMMA_INIT = 0.0, 0.0

    key = jax.random.PRNGKey(0)
    k_x, k_src, k_dst, k_w, k_p = jax.random.split(key, 5)

    x = jax.random.normal(k_x, (N, IN_C), jnp.float32)
    src = jax.random.randint(k_src, (E,), 0, N)
    dst = jax.random.randint(k_dst, (E,), 0, N)
    edge_index = jnp.stack([src, dst], axis=0)                     # [2, E]
    edge_weight = jax.random.uniform(k_w, (E,), jnp.float32) / N   # [E]

    params = init_params(k_p, IN_C, HID, OUT_C, BETA_INIT, GAMMA_INIT)
    adj = densify_graph(edge_index, edge_weight, N)

    out = model_forward(x, adj, params, max_iter=MAX_ITER)
    jax.block_until_ready(out)
    assert out.shape == (N, OUT_C) and out.dtype == jnp.float32
    assert bool(jnp.all(jnp.isfinite(out)))
    print("KERNEL_OK")
</pallas_src>

<mosaic_0001>
module attributes {stable_mosaic.version = 11 : i64} {
  func.func @_model_kernel(%arg0: memref<16x128xbf16, #tpu.memory_space<vmem>>, %arg1: memref<128x128xbf16, #tpu.memory_space<vmem>>, %arg2: memref<32x16xbf16, #tpu.memory_space<vmem>>, %arg3: memref<32x1xf32, #tpu.memory_space<vmem>>, %arg4: memref<64x32xbf16, #tpu.memory_space<vmem>>, %arg5: memref<32x64xbf16, #tpu.memory_space<vmem>>, %arg6: memref<16x32xbf16, #tpu.memory_space<vmem>>, %arg7: memref<16x1xf32, #tpu.memory_space<vmem>>, %arg8: memref<16x128xf32, #tpu.memory_space<vmem>>) attributes {dimension_semantics = [], scalar_prefetch = 0 : i64, scratch_operands = 0 : i64, tpu.core_type = #tpu.core_type<tc>} {
    %c0 = arith.constant 0 : index
    %c0_0 = arith.constant 0 : index
    %0 = vector.load %arg2[%c0, %c0_0] : memref<32x16xbf16, #tpu.memory_space<vmem>>, vector<32x16xbf16>
    %c0_1 = arith.constant 0 : index
    %c0_2 = arith.constant 0 : index
    %1 = vector.load %arg0[%c0_1, %c0_2] : memref<16x128xbf16, #tpu.memory_space<vmem>>, vector<16x128xbf16>
    %cst = arith.constant dense<0.000000e+00> : vector<32x128xf32>
    %2 = tpu.matmul %0, %1, %cst {dimension_numbers = #tpu.dot_dimension_numbers<[1], [0], [0], [1], [0, 0, 1, 1], [], []>} : vector<32x16xbf16>, vector<16x128xbf16>, vector<32x128xf32> -> vector<32x128xf32>
    %c0_3 = arith.constant 0 : index
    %c0_4 = arith.constant 0 : index
    %3 = vector.load %arg3[%c0_3, %c0_4] : memref<32x1xf32, #tpu.memory_space<vmem>>, vector<32x1xf32>
    %4 = vector.broadcast %3 : vector<32x1xf32> to vector<32x128xf32>
    %5 = arith.addf %2, %4 : vector<32x128xf32>
    %c0_5 = arith.constant 0 : index
    %c0_6 = arith.constant 0 : index
    %6 = vector.load %arg4[%c0_5, %c0_6] : memref<64x32xbf16, #tpu.memory_space<vmem>>, vector<64x32xbf16>
    %7 = arith.truncf %5 : vector<32x128xf32> to vector<32x128xbf16>
    %cst_7 = arith.constant dense<0.000000e+00> : vector<64x128xf32>
    %8 = tpu.matmul %6, %7, %cst_7 {dimension_numbers = #tpu.dot_dimension_numbers<[1], [0], [0], [1], [0, 0, 1, 1], [], []>} : vector<64x32xbf16>, vector<32x128xbf16>, vector<64x128xf32> -> vector<64x128xf32>
    %9 = math.tanh %8 : vector<64x128xf32>
    %c0_8 = arith.constant 0 : index
    %c0_9 = arith.constant 0 : index
    %10 = vector.load %arg5[%c0_8, %c0_9] : memref<32x64xbf16, #tpu.memory_space<vmem>>, vector<32x64xbf16>
    %11 = arith.truncf %9 : vector<64x128xf32> to vector<64x128xbf16>
    %cst_10 = arith.constant dense<0.000000e+00> : vector<32x128xf32>
    %12 = tpu.matmul %10, %11, %cst_10 {dimension_numbers = #tpu.dot_dimension_numbers<[1], [0], [0], [1], [0, 0, 1, 1], [], []>} : vector<32x64xbf16>, vector<64x128xbf16>, vector<32x128xf32> -> vector<32x128xf32>
    %c0_11 = arith.constant 0 : index
    %c0_12 = arith.constant 0 : index
    %13 = vector.load %arg1[%c0_11, %c0_12] : memref<128x128xbf16, #tpu.memory_space<vmem>>, vector<128x128xbf16>
    %cst_13 = arith.constant 0.000000e+00 : bf16
    %14 = vector.broadcast %cst_13 : bf16 to vector<32x128xbf16>
    %c0_i32 = arith.constant 0 : i32
    %cst_14 = arith.constant dense<0.000000e+00> : vector<32x128xf32>
    %15 = tpu.matmul %14, %13, %cst_14 {dimension_numbers = #tpu.dot_dimension_numbers<[1], [0], [0], [1], [0, 0, 1, 1], [], []>} : vector<32x128xbf16>, vector<128x128xbf16>, vector<32x128xf32> -> vector<32x128xf32>
    %16 = arith.addf %15, %12 : vector<32x128xf32>
    %cst_15 = arith.constant 0.000000e+00 : f32
    %17 = vector.broadcast %cst_15 : f32 to vector<32x128xf32>
    %18 = arith.maximumf %16, %17 : vector<32x128xf32>
    %19 = arith.truncf %18 : vector<32x128xf32> to vector<32x128xbf16>
    %c1_i32 = arith.constant 1 : i32
    %cst_16 = arith.constant dense<0.000000e+00> : vector<32x128xf32>
    %20 = tpu.matmul %19, %13, %cst_16 {dimension_numbers = #tpu.dot_dimension_numbers<[1], [0], [0], [1], [0, 0, 1, 1], [], []>} : vector<32x128xbf16>, vector<128x128xbf16>, vector<32x128xf32> -> vector<32x128xf32>
    %21 = arith.addf %20, %12 : vector<32x128xf32>
    %cst_17 = arith.constant 0.000000e+00 : f32
    %22 = vector.broadcast %cst_17 : f32 to vector<32x128xf32>
    %23 = arith.maximumf %21, %22 : vector<32x128xf32>
    %24 = arith.truncf %23 : vector<32x128xf32> to vector<32x128xbf16>
    %c2_i32 = arith.constant 2 : i32
    %cst_18 = arith.constant dense<0.000000e+00> : vector<32x128xf32>
    %25 = tpu.matmul %24, %13, %cst_18 {dimension_numbers = #tpu.dot_dimension_numbers<[1], [0], [0], [1], [0, 0, 1, 1], [], []>} : vector<32x128xbf16>, vector<128x128xbf16>, vector<32x128xf32> -> vector<32x128xf32>
    %26 = arith.addf %25, %12 : vector<32x128xf32>
    %cst_19 = arith.constant 0.000000e+00 : f32
    %27 = vector.broadcast %cst_19 : f32 to vector<32x128xf32>
    %28 = arith.maximumf %26, %27 : vector<32x128xf32>
    %29 = arith.truncf %28 : vector<32x128xf32> to vector<32x128xbf16>
    %c3_i32 = arith.constant 3 : i32
    %cst_20 = arith.constant dense<0.000000e+00> : vector<32x128xf32>
    %30 = tpu.matmul %29, %13, %cst_20 {dimension_numbers = #tpu.dot_dimension_numbers<[1], [0], [0], [1], [0, 0, 1, 1], [], []>} : vector<32x128xbf16>, vector<128x128xbf16>, vector<32x128xf32> -> vector<32x128xf32>
    %31 = arith.addf %30, %12 : vector<32x128xf32>
    %cst_21 = arith.constant 0.000000e+00 : f32
    %32 = vector.broadcast %cst_21 : f32 to vector<32x128xf32>
    %33 = arith.maximumf %31, %32 : vector<32x128xf32>
    %34 = arith.truncf %33 : vector<32x128xf32> to vector<32x128xbf16>
    %c4_i32 = arith.constant 4 : i32
    %cst_22 = arith.constant dense<0.000000e+00> : vector<32x128xf32>
    %35 = tpu.matmul %34, %13, %cst_22 {dimension_numbers = #tpu.dot_dimension_numbers<[1], [0], [0], [1], [0, 0, 1, 1], [], []>} : vector<32x128xbf16>, vector<128x128xbf16>, vector<32x128xf32> -> vector<32x128xf32>
    %36 = arith.addf %35, %12 : vector<32x128xf32>
    %cst_23 = arith.constant 0.000000e+00 : f32
    %37 = vector.broadcast %cst_23 : f32 to vector<32x128xf32>
    %38 = arith.maximumf %36, %37 : vector<32x128xf32>
    %39 = arith.truncf %38 : vector<32x128xf32> to vector<32x128xbf16>
    %c5_i32 = arith.constant 5 : i32
    %cst_24 = arith.constant dense<0.000000e+00> : vector<32x128xf32>
    %40 = tpu.matmul %39, %13, %cst_24 {dimension_numbers = #tpu.dot_dimension_numbers<[1], [0], [0], [1], [0, 0, 1, 1], [], []>} : vector<32x128xbf16>, vector<128x128xbf16>, vector<32x128xf32> -> vector<32x128xf32>
    %41 = arith.addf %40, %12 : vector<32x128xf32>
    %cst_25 = arith.constant 0.000000e+00 : f32
    %42 = vector.broadcast %cst_25 : f32 to vector<32x128xf32>
    %43 = arith.maximumf %41, %42 : vector<32x128xf32>
    %44 = arith.truncf %43 : vector<32x128xf32> to vector<32x128xbf16>
    %c6_i32 = arith.constant 6 : i32
    %cst_26 = arith.constant dense<0.000000e+00> : vector<32x128xf32>
    %45 = tpu.matmul %44, %13, %cst_26 {dimension_numbers = #tpu.dot_dimension_numbers<[1], [0], [0], [1], [0, 0, 1, 1], [], []>} : vector<32x128xbf16>, vector<128x128xbf16>, vector<32x128xf32> -> vector<32x128xf32>
    %46 = arith.addf %45, %12 : vector<32x128xf32>
    %cst_27 = arith.constant 0.000000e+00 : f32
    %47 = vector.broadcast %cst_27 : f32 to vector<32x128xf32>
    %48 = arith.maximumf %46, %47 : vector<32x128xf32>
    %49 = arith.truncf %48 : vector<32x128xf32> to vector<32x128xbf16>
    %c7_i32 = arith.constant 7 : i32
    %cst_28 = arith.constant dense<0.000000e+00> : vector<32x128xf32>
    %50 = tpu.matmul %49, %13, %cst_28 {dimension_numbers = #tpu.dot_dimension_numbers<[1], [0], [0], [1], [0, 0, 1, 1], [], []>} : vector<32x128xbf16>, vector<128x128xbf16>, vector<32x128xf32> -> vector<32x128xf32>
    %51 = arith.addf %50, %12 : vector<32x128xf32>
    %cst_29 = arith.constant 0.000000e+00 : f32
    %52 = vector.broadcast %cst_29 : f32 to vector<32x128xf32>
    %53 = arith.maximumf %51, %52 : vector<32x128xf32>
    %54 = arith.truncf %53 : vector<32x128xf32> to vector<32x128xbf16>
    %c8_i32 = arith.constant 8 : i32
    %cst_30 = arith.constant dense<0.000000e+00> : vector<32x128xf32>
    %55 = tpu.matmul %54, %13, %cst_30 {dimension_numbers = #tpu.dot_dimension_numbers<[1], [0], [0], [1], [0, 0, 1, 1], [], []>} : vector<32x128xbf16>, vector<128x128xbf16>, vector<32x128xf32> -> vector<32x128xf32>
    %56 = arith.addf %55, %12 : vector<32x128xf32>
    %cst_31 = arith.constant 0.000000e+00 : f32
    %57 = vector.broadcast %cst_31 : f32 to vector<32x128xf32>
    %58 = arith.maximumf %56, %57 : vector<32x128xf32>
    %59 = arith.truncf %58 : vector<32x128xf32> to vector<32x128xbf16>
    %c9_i32 = arith.constant 9 : i32
    %cst_32 = arith.constant dense<0.000000e+00> : vector<32x128xf32>
    %60 = tpu.matmul %59, %13, %cst_32 {dimension_numbers = #tpu.dot_dimension_numbers<[1], [0], [0], [1], [0, 0, 1, 1], [], []>} : vector<32x128xbf16>, vector<128x128xbf16>, vector<32x128xf32> -> vector<32x128xf32>
    %61 = arith.addf %60, %12 : vector<32x128xf32>
    %cst_33 = arith.constant 0.000000e+00 : f32
    %62 = vector.broadcast %cst_33 : f32 to vector<32x128xf32>
    %63 = arith.maximumf %61, %62 : vector<32x128xf32>
    %64 = arith.truncf %63 : vector<32x128xf32> to vector<32x128xbf16>
    %c10_i32 = arith.constant 10 : i32
    %cst_34 = arith.constant dense<0.000000e+00> : vector<32x128xf32>
    %65 = tpu.matmul %64, %13, %cst_34 {dimension_numbers = #tpu.dot_dimension_numbers<[1], [0], [0], [1], [0, 0, 1, 1], [], []>} : vector<32x128xbf16>, vector<128x128xbf16>, vector<32x128xf32> -> vector<32x128xf32>
    %66 = arith.addf %65, %12 : vector<32x128xf32>
    %cst_35 = arith.constant 0.000000e+00 : f32
    %67 = vector.broadcast %cst_35 : f32 to vector<32x128xf32>
    %68 = arith.maximumf %66, %67 : vector<32x128xf32>
    %69 = arith.truncf %68 : vector<32x128xf32> to vector<32x128xbf16>
    %c11_i32 = arith.constant 11 : i32
    %cst_36 = arith.constant dense<0.000000e+00> : vector<32x128xf32>
    %70 = tpu.matmul %69, %13, %cst_36 {dimension_numbers = #tpu.dot_dimension_numbers<[1], [0], [0], [1], [0, 0, 1, 1], [], []>} : vector<32x128xbf16>, vector<128x128xbf16>, vector<32x128xf32> -> vector<32x128xf32>
    %71 = arith.addf %70, %12 : vector<32x128xf32>
    %cst_37 = arith.constant 0.000000e+00 : f32
    %72 = vector.broadcast %cst_37 : f32 to vector<32x128xf32>
    %73 = arith.maximumf %71, %72 : vector<32x128xf32>
    %74 = arith.truncf %73 : vector<32x128xf32> to vector<32x128xbf16>
    %c12_i32 = arith.constant 12 : i32
    %cst_38 = arith.constant dense<0.000000e+00> : vector<32x128xf32>
    %75 = tpu.matmul %74, %13, %cst_38 {dimension_numbers = #tpu.dot_dimension_numbers<[1], [0], [0], [1], [0, 0, 1, 1], [], []>} : vector<32x128xbf16>, vector<128x128xbf16>, vector<32x128xf32> -> vector<32x128xf32>
    %76 = arith.addf %75, %12 : vector<32x128xf32>
    %cst_39 = arith.constant 0.000000e+00 : f32
    %77 = vector.broadcast %cst_39 : f32 to vector<32x128xf32>
    %78 = arith.maximumf %76, %77 : vector<32x128xf32>
    %79 = arith.truncf %78 : vector<32x128xf32> to vector<32x128xbf16>
    %c13_i32 = arith.constant 13 : i32
    %cst_40 = arith.constant dense<0.000000e+00> : vector<32x128xf32>
    %80 = tpu.matmul %79, %13, %cst_40 {dimension_numbers = #tpu.dot_dimension_numbers<[1], [0], [0], [1], [0, 0, 1, 1], [], []>} : vector<32x128xbf16>, vector<128x128xbf16>, vector<32x128xf32> -> vector<32x128xf32>
    %81 = arith.addf %80, %12 : vector<32x128xf32>
    %cst_41 = arith.constant 0.000000e+00 : f32
    %82 = vector.broadcast %cst_41 : f32 to vector<32x128xf32>
    %83 = arith.maximumf %81, %82 : vector<32x128xf32>
    %84 = arith.truncf %83 : vector<32x128xf32> to vector<32x128xbf16>
    %c14_i32 = arith.constant 14 : i32
    %cst_42 = arith.constant dense<0.000000e+00> : vector<32x128xf32>
    %85 = tpu.matmul %84, %13, %cst_42 {dimension_numbers = #tpu.dot_dimension_numbers<[1], [0], [0], [1], [0, 0, 1, 1], [], []>} : vector<32x128xbf16>, vector<128x128xbf16>, vector<32x128xf32> -> vector<32x128xf32>
    %86 = arith.addf %85, %12 : vector<32x128xf32>
    %cst_43 = arith.constant 0.000000e+00 : f32
    %87 = vector.broadcast %cst_43 : f32 to vector<32x128xf32>
    %88 = arith.maximumf %86, %87 : vector<32x128xf32>
    %89 = arith.truncf %88 : vector<32x128xf32> to vector<32x128xbf16>
    %c15_i32 = arith.constant 15 : i32
    %cst_44 = arith.constant dense<0.000000e+00> : vector<32x128xf32>
    %90 = tpu.matmul %89, %13, %cst_44 {dimension_numbers = #tpu.dot_dimension_numbers<[1], [0], [0], [1], [0, 0, 1, 1], [], []>} : vector<32x128xbf16>, vector<128x128xbf16>, vector<32x128xf32> -> vector<32x128xf32>
    %91 = arith.addf %90, %12 : vector<32x128xf32>
    %cst_45 = arith.constant 0.000000e+00 : f32
    %92 = vector.broadcast %cst_45 : f32 to vector<32x128xf32>
    %93 = arith.maximumf %91, %92 : vector<32x128xf32>
    %94 = arith.truncf %93 : vector<32x128xf32> to vector<32x128xbf16>
    %95 = arith.extf %94 : vector<32x128xbf16> to vector<32x128xf32>
    %cst_46 = arith.constant 5.000000e-01 : f32
    %96 = vector.broadcast %cst_46 : f32 to vector<32x128xf32>
    %97 = arith.mulf %96, %95 : vector<32x128xf32>
    %cst_47 = arith.constant 0.707106769 : f32
    %98 = vector.broadcast %cst_47 : f32 to vector<32x128xf32>
    %99 = arith.mulf %95, %98 : vector<32x128xf32>
    %100 = math.erf %99 : vector<32x128xf32>
    %cst_48 = arith.constant 1.000000e+00 : f32
    %101 = vector.broadcast %cst_48 : f32 to vector<32x128xf32>
    %102 = arith.addf %101, %100 : vector<32x128xf32>
    %103 = arith.mulf %97, %102 : vector<32x128xf32>
    %104 = arith.addf %5, %103 : vector<32x128xf32>
    %c0_49 = arith.constant 0 : index
    %c0_50 = arith.constant 0 : index
    %105 = vector.load %arg6[%c0_49, %c0_50] : memref<16x32xbf16, #tpu.memory_space<vmem>>, vector<16x32xbf16>
    %106 = arith.truncf %104 : vector<32x128xf32> to vector<32x128xbf16>
    %cst_51 = arith.constant dense<0.000000e+00> : vector<16x128xf32>
    %107 = tpu.matmul %105, %106, %cst_51 {dimension_numbers = #tpu.dot_dimension_numbers<[1], [0], [0], [1], [0, 0, 1, 1], [], []>} : vector<16x32xbf16>, vector<32x128xbf16>, vector<16x128xf32> -> vector<16x128xf32>
    %c0_52 = arith.constant 0 : index
    %c0_53 = arith.constant 0 : index
    %108 = vector.load %arg7[%c0_52, %c0_53] : memref<16x1xf32, #tpu.memory_space<vmem>>, vector<16x1xf32>
    %109 = vector.broadcast %108 : vector<16x1xf32> to vector<16x128xf32>
    %110 = arith.addf %107, %109 : vector<16x128xf32>
    %c0_54 = arith.constant 0 : index
    %c0_55 = arith.constant 0 : index
    %111 = vector.load %arg8[%c0_54, %c0_55] : memref<16x128xf32, #tpu.memory_space<vmem>>, vector<16x128xf32>
    tpu.vector_store %arg8[%c0_54, %c0_55], %110 {strides = array<i32>} : memref<16x128xf32, #tpu.memory_space<vmem>>, vector<16x128xf32>,
    return
  }
}

</mosaic_0001>

<llo_original>
// kernel: tpu_custom_call.1
$region0: #{tpu_custom_call.1}
  #allocation0 [shape = 'u32[]', space=smem, size = 0x4, offset = 0x4, fixed_abs, tag = 'smem constant byte address 0x4 - core index']
  #allocation1 [shape = 'u32[144,128]{1,0:T(1,128)}', space=vmem, size = 0x12000, scoped, tag = 'internal scratch']
  %s0 = inlined_call_operand.vmem [shape: bf16[16,128], index: 0, kind: input, shape index: {}]
  %s1 = inlined_call_operand.vmem [shape: bf16[128,128], index: 1, kind: input, shape index: {}]
  %s2 = inlined_call_operand.vmem [shape: bf16[32,16], index: 2, kind: input, shape index: {}]
  %s3 = inlined_call_operand.vmem [shape: f32[32,1], index: 3, kind: input, shape index: {}]
  %s4 = inlined_call_operand.vmem [shape: bf16[64,32], index: 4, kind: input, shape index: {}]
  %s5 = inlined_call_operand.vmem [shape: bf16[32,64], index: 5, kind: input, shape index: {}]
  %s6 = inlined_call_operand.vmem [shape: bf16[16,32], index: 6, kind: input, shape index: {}]
  %s7 = inlined_call_operand.vmem [shape: f32[16,1], index: 7, kind: input, shape index: {}]
  %s8 = inlined_call_operand.hbm [shape: f32[16,128], index: 8, kind: output, shape index: {}]
  %s9 = sld [smem:[#allocation0]]
  $region42: #{tpu_custom_call.1} parent=0
    _
  %s11 = ssub.s32 1, %s9
  %s12 = scalar_select 0, %s11, %s9
  $region1: #{tpu_custom_call.1} parent=0
    #allocation2 [shape = 'u8[8192]{0}', space=vmem, size = 0x2000, scoped, tag = 'output window, operand 0, single buffered']
    #allocation3 [shape = 's32[1]{0}', space=sflag, size = 0x4, scoped, tag = 'scoped memory for tpu_custom_call.1']
    %13 = vsyncpa [#allocation3], 0
    // Predicated region
    $region2: #{tpu_custom_call.1} parent=1 // pred_check
      _
    $region3: #{tpu_custom_call.1} parent=1 // pred_check_branch
      %15 = sbr.rel (0) target = $region5
    $region4: #{tpu_custom_call.1} parent=1 // pred_region
      _
    $region5: #{tpu_custom_call.1} parent=1 // pred_fallthru
      _
    // Predicated region
    $region6: #{tpu_custom_call.1} parent=1 // pred_check
      _
    $region7: #{tpu_custom_call.1} parent=1 // pred_check_branch
      %17 = sbr.rel (0) target = $region9
    $region8: #{tpu_custom_call.1} parent=1 // pred_region
      _
    $region9: #{tpu_custom_call.1} parent=1 // pred_fallthru
      _
    // Predicated region
    $region10: #{tpu_custom_call.1} parent=1 // pred_check
      _
    $region11: #{tpu_custom_call.1} parent=1 // pred_check_branch
      %19 = sbr.rel (0) target = $region13
    $region12: #{tpu_custom_call.1} parent=1 // pred_region
      _
    $region13: #{tpu_custom_call.1} parent=1 // pred_fallthru
      _
    // Predicated region
    $region14: #{tpu_custom_call.1} parent=1 // pred_check
      _
    $region15: #{tpu_custom_call.1} parent=1 // pred_check_branch
      %21 = sbr.rel (0) target = $region17
    $region16: #{tpu_custom_call.1} parent=1 // pred_region
      _
    $region17: #{tpu_custom_call.1} parent=1 // pred_fallthru
      _
    // Predicated region
    $region18: #{tpu_custom_call.1} parent=1 // pred_check
      _
    $region19: #{tpu_custom_call.1} parent=1 // pred_check_branch
      %23 = sbr.rel (0) target = $region21
    $region20: #{tpu_custom_call.1} parent=1 // pred_region
      _
    $region21: #{tpu_custom_call.1} parent=1 // pred_fallthru
      _
    // Predicated region
    $region22: #{tpu_custom_call.1} parent=1 // pred_check
      _
    $region23: #{tpu_custom_call.1} parent=1 // pred_check_branch
      %25 = sbr.rel (0) target = $region25
    $region24: #{tpu_custom_call.1} parent=1 // pred_region
      _
    $region25: #{tpu_custom_call.1} parent=1 // pred_fallthru
      _
    // Predicated region
    $region26: #{tpu_custom_call.1} parent=1 // pred_check
      _
    $region27: #{tpu_custom_call.1} parent=1 // pred_check_branch
      %27 = sbr.rel (0) target = $region29
    $region28: #{tpu_custom_call.1} parent=1 // pred_region
      _
    $region29: #{tpu_custom_call.1} parent=1 // pred_fallthru
      _
    // Predicated region
    $region30: #{tpu_custom_call.1} parent=1 // pred_check
      _
    $region31: #{tpu_custom_call.1} parent=1 // pred_check_branch
      %29 = sbr.rel (0) target = $region33
    $region32: #{tpu_custom_call.1} parent=1 // pred_region
      _
    $region33: #{tpu_custom_call.1} parent=1 // pred_fallthru
      _
    %v31 = vld [vmem:[%s2] sm:$0xf]
    %v32 = vld [vmem:[%s2 + $0x4] sm:$0xf]
    %v33 = vld [vmem:[%s2 + $0x8] sm:$0xf]
    %v34 = vld [vmem:[%s2 + $0xc] sm:$0xf]
    %v35 = vld [vmem:[%s0] sm:$0xf]
    %v36 = vld [vmem:[%s0 + $0x4] sm:$0xf]
    %v37 = vld [vmem:[%s3] sm:$0xff]
    %v38 = vld [vmem:[%s3 + $0x8] sm:$0xff]
    %v39 = vld [vmem:[%s3 + $0x10] sm:$0xff]
    %v40 = vld [vmem:[%s3 + $0x18] sm:$0xff]
    %42 = vset.pattern.permute.xlu0 0
    %43 = vperm.xlu0 %42, %v37
    %v44 = vpop.permute.xlu0 %43
    %47 = vset.pattern.permute.xlu0 0
    %48 = vperm.xlu0 %47, %v38
    %v49 = vpop.permute.xlu0 %48
    %52 = vset.pattern.permute.xlu0 0
    %53 = vperm.xlu0 %52, %v39
    %v54 = vpop.permute.xlu0 %53
    %57 = vset.pattern.permute.xlu0 0
    %58 = vperm.xlu0 %57, %v40
    %v59 = vpop.permute.xlu0 %58
    %v65 = vunpack.c.l.b16 %v31
    %v66 = vunpack.c.l.b16 %v32
    %v67 = vunpack.c.l.b16 %v33
    %v68 = vunpack.c.l.b16 %v34
    %v69 = vpack.c.b16 %v66, %v65
    %v70 = vpack.c.b16 %v68, %v67
    %v73 = vunpack.c.l.b16 %v35
    %v74 = vunpack.c.l.b16 %v36
    %v75 = vpack.c.b16 %v74, %v73
    %vm77 = vcmask 130048
    %v79 = vsel %vm77, %v69, 0
    %v82 = vsel %vm77, %v70, 0
    %84 = vmatprep.subr.bf16.mxu0 0
    %85 = vmatpush1.bf16.msra.mxu0 %v75
    %86 = vmatprep.subr.bf16.mxu0 0
    %87 = vmatpush1.bf16.msra.mxu0 0
    %88 = vmatprep.subr.bf16.mxu0 0
    %89 = vmatpush1.bf16.msra.mxu0 0
    %90 = vmatprep.subr.bf16.mxu0 0
    %91 = vmatpush1.bf16.msra.mxu0 0
    %92 = vmatprep.subr.bf16.mxu0 0
    %93 = vmatpush1.bf16.msra.mxu0 0
    %94 = vmatprep.subr.bf16.mxu0 0
    %95 = vmatpush1.bf16.msra.mxu0 0
    %96 = vmatprep.subr.bf16.mxu0 0
    %97 = vmatpush1.bf16.msra.mxu0 0
    %98 = vmatprep.subr.bf16.mxu0 0
    %99 = vmatpush1.bf16.msra.mxu0 0
    %100 = vmatprep.subr.bf16.mxu0 0
    %101 = vmatpush1.bf16.msra.mxu0 0
    %102 = vmatprep.subr.bf16.mxu0 0
    %103 = vmatpush1.bf16.msra.mxu0 0
    %104 = vmatprep.subr.bf16.mxu0 0
    %105 = vmatpush1.bf16.msra.mxu0 0
    %106 = vmatprep.subr.bf16.mxu0 0
    %107 = vmatpush1.bf16.msra.mxu0 0
    %108 = vmatprep.subr.bf16.mxu0 0
    %109 = vmatpush1.bf16.msra.mxu0 0
    %110 = vmatprep.subr.bf16.mxu0 0
    %111 = vmatpush1.bf16.msra.mxu0 0
    %112 = vmatprep.subr.bf16.mxu0 0
    %113 = vmatpush1.bf16.msra.mxu0 0
    %114 = vmatprep.subr.bf16.mxu0 0
    %115 = vmatpush1.bf16.msra.mxu0 0
    %116 = vmatprep.mubr.bf16.mxu0 0
    %117 = vmatmul.mubr.bf16.gmra.mrb[0].mxu0 %v79
    %v118 = vpop.f32.mrb[0].mxu0
    %v119 = vadd.f32 %v44, %v118
    %v120 = vpop.f32.mrb[0].mxu0
    %v121 = vpop.f32.mrb[0].mxu0
    %v122 = vadd.f32 %v49, %v121
    %v123 = vpop.f32.mrb[0].mxu0
    %124 = vmatprep.mubr.bf16.mxu0 0
    %125 = vmatmul.mubr.bf16.gmra.mrb[0].mxu0 %v82
    %v126 = vpop.f32.mrb[0].mxu0
    %v127 = vadd.f32 %v54, %v126
    %v128 = vpop.f32.mrb[0].mxu0
    %v129 = vpop.f32.mrb[0].mxu0
    %v130 = vadd.f32 %v59, %v129
    %v131 = vpop.f32.mrb[0].mxu0
    %132 = vdwg.mxu0
    %v133 = vld [vmem:[%s4] sm:$0xf]
    %v134 = vld [vmem:[%s4 + $0x4] sm:$0xf]
    %v135 = vld [vmem:[%s4 + $0x8] sm:$0xf]
    %v136 = vld [vmem:[%s4 + $0xc] sm:$0xf]
    %v137 = vld [vmem:[%s4 + $0x10] sm:$0xf]
    %v138 = vld [vmem:[%s4 + $0x14] sm:$0xf]
    %v139 = vld [vmem:[%s4 + $0x18] sm:$0xf]
    %v140 = vld [vmem:[%s4 + $0x1c] sm:$0xf]
    %v141 = vpack.c.bf16 %v122, %v119
    %v142 = vpack.c.bf16 %v130, %v127
    %v151 = vunpack.c.l.b16 %v133
    %v152 = vunpack.c.l.b16 %v134
    %v153 = vunpack.c.l.b16 %v135
    %v154 = vunpack.c.l.b16 %v136
    %v155 = vunpack.c.l.b16 %v137
    %v156 = vunpack.c.l.b16 %v138
    %v157 = vunpack.c.l.b16 %v139
    %v158 = vunpack.c.l.b16 %v140
    %v159 = vpack.c.b16 %v152, %v151
    %v160 = vpack.c.b16 %v154, %v153
    %v161 = vpack.c.b16 %v156, %v155
    %v162 = vpack.c.b16 %v158, %v157
    %vm163 = vcmask 261120
    %v165 = vsel %vm163, %v159, 0
    %v168 = vsel %vm163, %v160, 0
    %v171 = vsel %vm163, %v161, 0
    %v174 = vsel %vm163, %v162, 0
    %176 = vmatprep.subr.bf16.mxu0 0
    %177 = vmatpush1.bf16.msra.mxu0 %v141
    %178 = vmatprep.subr.bf16.mxu0 0
    %179 = vmatpush1.bf16.msra.mxu0 %v142
    %180 = vmatprep.subr.bf16.mxu0 0
    %181 = vmatpush1.bf16.msra.mxu0 0
    %182 = vmatprep.subr.bf16.mxu0 0
    %183 = vmatpush1.bf16.msra.mxu0 0
    %184 = vmatprep.subr.bf16.mxu0 0
    %185 = vmatpush1.bf16.msra.mxu0 0
    %186 = vmatprep.subr.bf16.mxu0 0
    %187 = vmatpush1.bf16.msra.mxu0 0
    %188 = vmatprep.subr.bf16.mxu0 0
    %189 = vmatpush1.bf16.msra.mxu0 0
    %190 = vmatprep.subr.bf16.mxu0 0
    %191 = vmatpush1.bf16.msra.mxu0 0
    %192 = vmatprep.subr.bf16.mxu0 0
    %193 = vmatpush1.bf16.msra.mxu0 0
    %194 = vmatprep.subr.bf16.mxu0 0
    %195 = vmatpush1.bf16.msra.mxu0 0
    %196 = vmatprep.subr.bf16.mxu0 0
    %197 = vmatpush1.bf16.msra.mxu0 0
    %198 = vmatprep.subr.bf16.mxu0 0
    %199 = vmatpush1.bf16.msra.mxu0 0
    %200 = vmatprep.subr.bf16.mxu0 0
    %201 = vmatpush1.bf16.msra.mxu0 0
    %202 = vmatprep.subr.bf16.mxu0 0
    %203 = vmatpush1.bf16.msra.mxu0 0
    %204 = vmatprep.subr.bf16.mxu0 0
    %205 = vmatpush1.bf16.msra.mxu0 0
    %206 = vmatprep.subr.bf16.mxu0 0
    %207 = vmatpush1.bf16.msra.mxu0 0
    %208 = vmatprep.mubr.bf16.mxu0 0
    %209 = vmatmul.mubr.bf16.gmra.mrb[0].mxu0 %v165
    %v210 = vpop.f32.mrb[0].mxu0
    %v211 = vadd.f32 0.0, %v210
    %v212 = vpop.f32.mrb[0].mxu0
    %v213 = vpop.f32.mrb[0].mxu0
    %v214 = vadd.f32 0.0, %v213
    %v215 = vpop.f32.mrb[0].mxu0
    %216 = vmatprep.mubr.bf16.mxu0 0
    %217 = vmatmul.mubr.bf16.gmra.mrb[0].mxu0 %v168
    %v218 = vpop.f32.mrb[0].mxu0
    %v219 = vadd.f32 0.0, %v218
    %v220 = vpop.f32.mrb[0].mxu0
    %v221 = vpop.f32.mrb[0].mxu0
    %v222 = vadd.f32 0.0, %v221
    %v223 = vpop.f32.mrb[0].mxu0
    %224 = vmatprep.mubr.bf16.mxu0 0
    %225 = vmatmul.mubr.bf16.gmra.mrb[0].mxu0 %v171
    %v226 = vpop.f32.mrb[0].mxu0
    %v227 = vadd.f32 0.0, %v226
    %v228 = vpop.f32.mrb[0].mxu0
    %v229 = vpop.f32.mrb[0].mxu0
    %v230 = vadd.f32 0.0, %v229
    %v231 = vpop.f32.mrb[0].mxu0
    %232 = vmatprep.mubr.bf16.mxu0 0
    %233 = vmatmul.mubr.bf16.gmra.mrb[0].mxu0 %v174
    %v234 = vpop.f32.mrb[0].mxu0
    %v235 = vadd.f32 0.0, %v234
    %v236 = vpop.f32.mrb[0].mxu0
    %v237 = vpop.f32.mrb[0].mxu0
    %v238 = vadd.f32 0.0, %v237
    %v239 = vpop.f32.mrb[0].mxu0
    %240 = vdwg.mxu0
    %v241 = vtanh.pop %v211
    %v242 = vtanh.pop %v214
    %v243 = vtanh.pop %v219
    %v244 = vtanh.pop %v222
    %v245 = vtanh.pop %v227
    %v246 = vtanh.pop %v230
    %v247 = vtanh.pop %v235
    %v248 = vtanh.pop %v238
    %v249 = vld [vmem:[%s5] sm:$0xf]
    %v250 = vld [vmem:[%s5 + $0x4] sm:$0xf]
    %v251 = vld [vmem:[%s5 + $0x8] sm:$0xf]
    %v252 = vld [vmem:[%s5 + $0xc] sm:$0xf]
    %v253 = vpack.c.bf16 %v242, %v241
    %v254 = vpack.c.bf16 %v244, %v243
    %v255 = vpack.c.bf16 %v246, %v245
    %v256 = vpack.c.bf16 %v248, %v247
    %v261 = vunpack.c.l.b16 %v249
    %v262 = vunpack.c.l.b16 %v250
    %v263 = vunpack.c.l.b16 %v251
    %v264 = vunpack.c.l.b16 %v252
    %v265 = vpack.c.b16 %v262, %v261
    %v266 = vpack.c.b16 %v264, %v263
    %vm267 = vcmask 523264
    %v269 = vsel %vm267, %v265, 0
    %v272 = vsel %vm267, %v266, 0
    %274 = vmatprep.subr.bf16.mxu0 0
    %275 = vmatpush1.bf16.msra.mxu0 %v253
    %276 = vmatprep.subr.bf16.mxu0 0
    %277 = vmatpush1.bf16.msra.mxu0 %v254
    %278 = vmatprep.subr.bf16.mxu0 0
    %279 = vmatpush1.bf16.msra.mxu0 %v255
    %280 = vmatprep.subr.bf16.mxu0 0
    %281 = vmatpush1.bf16.msra.mxu0 %v256
    %282 = vmatprep.subr.bf16.mxu0 0
    %283 = vmatpush1.bf16.msra.mxu0 0
    %284 = vmatprep.subr.bf16.mxu0 0
    %285 = vmatpush1.bf16.msra.mxu0 0
    %286 = vmatprep.subr.bf16.mxu0 0
    %287 = vmatpush1.bf16.msra.mxu0 0
    %288 = vmatprep.subr.bf16.mxu0 0
    %289 = vmatpush1.bf16.msra.mxu0 0
    %290 = vmatprep.subr.bf16.mxu0 0
    %291 = vmatpush1.bf16.msra.mxu0 0
    %292 = vmatprep.subr.bf16.mxu0 0
    %293 = vmatpush1.bf16.msra.mxu0 0
    %294 = vmatprep.subr.bf16.mxu0 0
    %295 = vmatpush1.bf16.msra.mxu0 0
    %296 = vmatprep.subr.bf16.mxu0 0
    %297 = vmatpush1.bf16.msra.mxu0 0
    %298 = vmatprep.subr.bf16.mxu0 0
    %299 = vmatpush1.bf16.msra.mxu0 0
    %300 = vmatprep.subr.bf16.mxu0 0
    %301 = vmatpush1.bf16.msra.mxu0 0
    %302 = vmatprep.subr.bf16.mxu0 0
    %303 = vmatpush1.bf16.msra.mxu0 0
    %304 = vmatprep.subr.bf16.mxu0 0
    %305 = vmatpush1.bf16.msra.mxu0 0
    %306 = vmatprep.mubr.bf16.mxu0 0
    %307 = vmatmul.mubr.bf16.gmra.mrb[0].mxu0 %v269
    %v308 = vpop.f32.mrb[0].mxu0
    %v309 = vadd.f32 0.0, %v308
    %v310 = vpop.f32.mrb[0].mxu0
    %v311 = vpop.f32.mrb[0].mxu0
    %v312 = vadd.f32 0.0, %v311
    %v313 = vpop.f32.mrb[0].mxu0
    %314 = vmatprep.mubr.bf16.mxu0 0
    %315 = vmatmul.mubr.bf16.gmra.mrb[0].mxu0 %v272
    %v316 = vpop.f32.mrb[0].mxu0
    %v317 = vadd.f32 0.0, %v316
    %v318 = vpop.f32.mrb[0].mxu0
    %v319 = vpop.f32.mrb[0].mxu0
    %v320 = vadd.f32 0.0, %v319
    %v321 = vpop.f32.mrb[0].mxu0
    %322 = vdwg.mxu0
    %v323 = vld [vmem:[%s1] sm:$0xf]
    %v324 = vld [vmem:[%s1 + $0x4] sm:$0xf]
    %v325 = vld [vmem:[%s1 + $0x8] sm:$0xf]
    %v326 = vld [vmem:[%s1 + $0xc] sm:$0xf]
    %v327 = vld [vmem:[%s1 + $0x10] sm:$0xf]
    %v328 = vld [vmem:[%s1 + $0x14] sm:$0xf]
    %v329 = vld [vmem:[%s1 + $0x18] sm:$0xf]
    %v330 = vld [vmem:[%s1 + $0x1c] sm:$0xf]
    %v331 = vld [vmem:[%s1 + $0x20] sm:$0xf]
    %v332 = vld [vmem:[%s1 + $0x24] sm:$0xf]
    %v333 = vld [vmem:[%s1 + $0x28] sm:$0xf]
    %v334 = vld [vmem:[%s1 + $0x2c] sm:$0xf]
    %v335 = vld [vmem:[%s1 + $0x30] sm:$0xf]
    %v336 = vld [vmem:[%s1 + $0x34] sm:$0xf]
    %v337 = vld [vmem:[%s1 + $0x38] sm:$0xf]
    %v338 = vld [vmem:[%s1 + $0x3c] sm:$0xf]
    %v355 = vunpack.c.l.b16 %v323
    %v356 = vunpack.c.l.b16 %v324
    %v357 = vunpack.c.l.b16 %v325
    %v358 = vunpack.c.l.b16 %v326
    %v359 = vunpack.c.l.b16 %v327
    %v360 = vunpack.c.l.b16 %v328
    %v361 = vunpack.c.l.b16 %v329
    %v362 = vunpack.c.l.b16 %v330
    %v363 = vunpack.c.l.b16 %v331
    %v364 = vunpack.c.l.b16 %v332
    %v365 = vunpack.c.l.b16 %v333
    %v366 = vunpack.c.l.b16 %v334
    %v367 = vunpack.c.l.b16 %v335
    %v368 = vunpack.c.l.b16 %v336
    %v369 = vunpack.c.l.b16 %v337
    %v370 = vunpack.c.l.b16 %v338
    %v371 = vpack.c.b16 %v356, %v355
    %v372 = vpack.c.b16 %v358, %v357
    %v373 = vpack.c.b16 %v360, %v359
    %v374 = vpack.c.b16 %v362, %v361
    %v375 = vpack.c.b16 %v364, %v363
    %v376 = vpack.c.b16 %v366, %v365
    %v377 = vpack.c.b16 %v368, %v367
    %v378 = vpack.c.b16 %v370, %v369
    %387 = vmatprep.subr.bf16.mxu0 0
    %388 = vmatpush1.bf16.msra.mxu0 %v371
    %389 = vmatprep.subr.bf16.mxu0 0
    %390 = vmatpush1.bf16.msra.mxu0 %v372
    %391 = vmatprep.subr.bf16.mxu0 0
    %392 = vmatpush1.bf16.msra.mxu0 %v373
    %393 = vmatprep.subr.bf16.mxu0 0
    %394 = vmatpush1.bf16.msra.mxu0 %v374
    %395 = vmatprep.subr.bf16.mxu0 0
    %396 = vmatpush1.bf16.msra.mxu0 %v375
    %397 = vmatprep.subr.bf16.mxu0 0
    %398 = vmatpush1.bf16.msra.mxu0 %v376
    %399 = vmatprep.subr.bf16.mxu0 0
    %400 = vmatpush1.bf16.msra.mxu0 %v377
    %401 = vmatprep.subr.bf16.mxu0 0
    %402 = vmatpush1.bf16.msra.mxu0 %v378
    %403 = vmatprep.subr.bf16.mxu0 0
    %404 = vmatpush1.bf16.msra.mxu0 0
    %405 = vmatprep.subr.bf16.mxu0 0
    %406 = vmatpush1.bf16.msra.mxu0 0
    %407 = vmatprep.subr.bf16.mxu0 0
    %408 = vmatpush1.bf16.msra.mxu0 0
    %409 = vmatprep.subr.bf16.mxu0 0
    %410 = vmatpush1.bf16.msra.mxu0 0
    %411 = vmatprep.subr.bf16.mxu0 0
    %412 = vmatpush1.bf16.msra.mxu0 0
    %413 = vmatprep.subr.bf16.mxu0 0
    %414 = vmatpush1.bf16.msra.mxu0 0
    %415 = vmatprep.subr.bf16.mxu0 0
    %416 = vmatpush1.bf16.msra.mxu0 0
    %417 = vmatprep.subr.bf16.mxu0 0
    %418 = vmatpush1.bf16.msra.mxu0 0
    %419 = vmatprep.mubr.bf16.mxu0 0
    %420 = vmatmul.mubr.bf16.gmra.mrb[0].mxu0 0
    %v421 = vpop.f32.mrb[0].mxu0
    %v422 = vadd.f32 %v309, %v421
    %v423 = vpop.f32.mrb[0].mxu0
    %v424 = vpop.f32.mrb[0].mxu0
    %v425 = vadd.f32 %v312, %v424
    %v426 = vpop.f32.mrb[0].mxu0
    %427 = vmatprep.mubr.bf16.mxu0 0
    %428 = vmatmul.mubr.bf16.gmra.mrb[0].mxu0 0
    %v429 = vpop.f32.mrb[0].mxu0
    %v430 = vadd.f32 %v317, %v429
    %v431 = vpop.f32.mrb[0].mxu0
    %v432 = vpop.f32.mrb[0].mxu0
    %v433 = vadd.f32 %v320, %v432
    %v434 = vpop.f32.mrb[0].mxu0
    %435 = vdwg.mxu0
    %v436 = vmax.f32 %v422, 0.0
    %v437 = vmax.f32 %v425, 0.0
    %v438 = vmax.f32 %v430, 0.0
    %v439 = vmax.f32 %v433, 0.0
    %v440 = vpack.c.bf16 %v437, %v436
    %v441 = vpack.c.bf16 %v439, %v438
    %442 = vmatprep.subr.bf16.mxu0 0
    %443 = vmatpush1.bf16.msra.mxu0 %v371
    %444 = vmatprep.subr.bf16.mxu0 0
    %445 = vmatpush1.bf16.msra.mxu0 %v372
    %446 = vmatprep.subr.bf16.mxu0 0
    %447 = vmatpush1.bf16.msra.mxu0 %v373
    %448 = vmatprep.subr.bf16.mxu0 0
    %449 = vmatpush1.bf16.msra.mxu0 %v374
    %450 = vmatprep.subr.bf16.mxu0 0
    %451 = vmatpush1.bf16.msra.mxu0 %v375
    %452 = vmatprep.subr.bf16.mxu0 0
    %453 = vmatpush1.bf16.msra.mxu0 %v376
    %454 = vmatprep.subr.bf16.mxu0 0
    %455 = vmatpush1.bf16.msra.mxu0 %v377
    %456 = vmatprep.subr.bf16.mxu0 0
    %457 = vmatpush1.bf16.msra.mxu0 %v378
    %458 = vmatprep.subr.bf16.mxu0 0
    %459 = vmatpush1.bf16.msra.mxu0 0
    %460 = vmatprep.subr.bf16.mxu0 0
    %461 = vmatpush1.bf16.msra.mxu0 0
    %462 = vmatprep.subr.bf16.mxu0 0
    %463 = vmatpush1.bf16.msra.mxu0 0
    %464 = vmatprep.subr.bf16.mxu0 0
    %465 = vmatpush1.bf16.msra.mxu0 0
    %466 = vmatprep.subr.bf16.mxu0 0
    %467 = vmatpush1.bf16.msra.mxu0 0
    %468 = vmatprep.subr.bf16.mxu0 0
    %469 = vmatpush1.bf16.msra.mxu0 0
    %470 = vmatprep.subr.bf16.mxu0 0
    %471 = vmatpush1.bf16.msra.mxu0 0
    %472 = vmatprep.subr.bf16.mxu0 0
    %473 = vmatpush1.bf16.msra.mxu0 0
    %474 = vmatprep.mubr.bf16.mxu0 0
    %475 = vmatmul.mubr.bf16.gmra.mrb[0].mxu0 %v440
    %v476 = vpop.f32.mrb[0].mxu0
    %v477 = vadd.f32 %v309, %v476
    %v478 = vpop.f32.mrb[0].mxu0
    %v479 = vpop.f32.mrb[0].mxu0
    %v480 = vadd.f32 %v312, %v479
    %v481 = vpop.f32.mrb[0].mxu0
    %482 = vmatprep.mubr.bf16.mxu0 0
    %483 = vmatmul.mubr.bf16.gmra.mrb[0].mxu0 %v441
    %v484 = vpop.f32.mrb[0].mxu0
    %v485 = vadd.f32 %v317, %v484
    %v486 = vpop.f32.mrb[0].mxu0
    %v487 = vpop.f32.mrb[0].mxu0
    %v488 = vadd.f32 %v320, %v487
    %v489 = vpop.f32.mrb[0].mxu0
    %490 = vdwg.mxu0
    %v491 = vmax.f32 %v477, 0.0
    %v492 = vmax.f32 %v480, 0.0
    %v493 = vmax.f32 %v485, 0.0
    %v494 = vmax.f32 %v488, 0.0
    %v495 = vpack.c.bf16 %v492, %v491
    %v496 = vpack.c.bf16 %v494, %v493
    %497 = vmatprep.subr.bf16.mxu0 0
    %498 = vmatpush1.bf16.msra.mxu0 %v371
    %499 = vmatprep.subr.bf16.mxu0 0
    %500 = vmatpush1.bf16.msra.mxu0 %v372
    %501 = vmatprep.subr.bf16.mxu0 0
    %502 = vmatpush1.bf16.msra.mxu0 %v373
    %503 = vmatprep.subr.bf16.mxu0 0
    %504 = vmatpush1.bf16.msra.mxu0 %v374
    %505 = vmatprep.subr.bf16.mxu0 0
    %506 = vmatpush1.bf16.msra.mxu0 %v375
    %507 = vmatprep.subr.bf16.mxu0 0
    %508 = vmatpush1.bf16.msra.mxu0 %v376
    %509 = vmatprep.subr.bf16.mxu0 0
    %510 = vmatpush1.bf16.msra.mxu0 %v377
    %511 = vmatprep.subr.bf16.mxu0 0
    %512 = vmatpush1.bf16.msra.mxu0 %v378
    %513 = vmatprep.subr.bf16.mxu0 0
    %514 = vmatpush1.bf16.msra.mxu0 0
    %515 = vmatprep.subr.bf16.mxu0 0
    %516 = vmatpush1.bf16.msra.mxu0 0
    %517 = vmatprep.subr.bf16.mxu0 0
    %518 = vmatpush1.bf16.msra.mxu0 0
    %519 = vmatprep.subr.bf16.mxu0 0
    %520 = vmatpush1.bf16.msra.mxu0 0
    %521 = vmatprep.subr.bf16.mxu0 0
    %522 = vmatpush1.bf16.msra.mxu0 0
    %523 = vmatprep.subr.bf16.mxu0 0
    %524 = vmatpush1.bf16.msra.mxu0 0
    %525 = vmatprep.subr.bf16.mxu0 0
    %526 = vmatpush1.bf16.msra.mxu0 0
    %527 = vmatprep.subr.bf16.mxu0 0
    %528 = vmatpush1.bf16.msra.mxu0 0
    %529 = vmatprep.mubr.bf16.mxu0 0
    %530 = vmatmul.mubr.bf16.gmra.mrb[0].mxu0 %v495
    %v531 = vpop.f32.mrb[0].mxu0
    %v532 = vadd.f32 %v309, %v531
    %v533 = vpop.f32.mrb[0].mxu0
    %v534 = vpop.f32.mrb[0].mxu0
    %v535 = vadd.f32 %v312, %v534
    %v536 = vpop.f32.mrb[0].mxu0
    %537 = vmatprep.mubr.bf16.mxu0 0
    %538 = vmatmul.mubr.bf16.gmra.mrb[0].mxu0 %v496
    %v539 = vpop.f32.mrb[0].mxu0
    %v540 = vadd.f32 %v317, %v539
    %v541 = vpop.f32.mrb[0].mxu0
    %v542 = vpop.f32.mrb[0].mxu0
    %v543 = vadd.f32 %v320, %v542
    %v544 = vpop.f32.mrb[0].mxu0
    %545 = vdwg.mxu0
    %v546 = vmax.f32 %v532, 0.0
    %v547 = vmax.f32 %v535, 0.0
    %v548 = vmax.f32 %v540, 0.0
    %v549 = vmax.f32 %v543, 0.0
    %v550 = vpack.c.bf16 %v547, %v546
    %v551 = vpack.c.bf16 %v549, %v548
    %552 = vmatprep.subr.bf16.mxu0 0
    %553 = vmatpush1.bf16.msra.mxu0 %v371
    %554 = vmatprep.subr.bf16.mxu0 0
    %555 = vmatpush1.bf16.msra.mxu0 %v372
    %556 = vmatprep.subr.bf16.mxu0 0
    %557 = vmatpush1.bf16.msra.mxu0 %v373
    %558 = vmatprep.subr.bf16.mxu0 0
    %559 = vmatpush1.bf16.msra.mxu0 %v374
    %560 = vmatprep.subr.bf16.mxu0 0
    %561 = vmatpush1.bf16.msra.mxu0 %v375
    %562 = vmatprep.subr.bf16.mxu0 0
    %563 = vmatpush1.bf16.msra.mxu0 %v376
    %564 = vmatprep.subr.bf16.mxu0 0
    %565 = vmatpush1.bf16.msra.mxu0 %v377
    %566 = vmatprep.subr.bf16.mxu0 0
    %567 = vmatpush1.bf16.msra.mxu0 %v378
    %568 = vmatprep.subr.bf16.mxu0 0
    %569 = vmatpush1.bf16.msra.mxu0 0
    %570 = vmatprep.subr.bf16.mxu0 0
    %571 = vmatpush1.bf16.msra.mxu0 0
    %572 = vmatprep.subr.bf16.mxu0 0
    %573 = vmatpush1.bf16.msra.mxu0 0
    %574 = vmatprep.subr.bf16.mxu0 0
    %575 = vmatpush1.bf16.msra.mxu0 0
    %576 = vmatprep.subr.bf16.mxu0 0
    %577 = vmatpush1.bf16.msra.mxu0 0
    %578 = vmatprep.subr.bf16.mxu0 0
    %579 = vmatpush1.bf16.msra.mxu0 0
    %580 = vmatprep.subr.bf16.mxu0 0
    %581 = vmatpush1.bf16.msra.mxu0 0
    %582 = vmatprep.subr.bf16.mxu0 0
    %583 = vmatpush1.bf16.msra.mxu0 0
    %584 = vmatprep.mubr.bf16.mxu0 0
    %585 = vmatmul.mubr.bf16.gmra.mrb[0].mxu0 %v550
    %v586 = vpop.f32.mrb[0].mxu0
    %v587 = vadd.f32 %v309, %v586
    %v588 = vpop.f32.mrb[0].mxu0
    %v589 = vpop.f32.mrb[0].mxu0
    %v590 = vadd.f32 %v312, %v589
    %v591 = vpop.f32.mrb[0].mxu0
    %592 = vmatprep.mubr.bf16.mxu0 0
    %593 = vmatmul.mubr.bf16.gmra.mrb[0].mxu0 %v551
    %v594 = vpop.f32.mrb[0].mxu0
    %v595 = vadd.f32 %v317, %v594
    %v596 = vpop.f32.mrb[0].mxu0
    %v597 = vpop.f32.mrb[0].mxu0
    %v598 = vadd.f32 %v320, %v597
    %v599 = vpop.f32.mrb[0].mxu0
    %600 = vdwg.mxu0
    %v601 = vmax.f32 %v587, 0.0
    %v602 = vmax.f32 %v590, 0.0
    %v603 = vmax.f32 %v595, 0.0
    %v604 = vmax.f32 %v598, 0.0
    %v605 = vpack.c.bf16 %v602, %v601
    %v606 = vpack.c.bf16 %v604, %v603
    %607 = vmatprep.subr.bf16.mxu0 0
    %608 = vmatpush1.bf16.msra.mxu0 %v371
    %609 = vmatprep.subr.bf16.mxu0 0
    %610 = vmatpush1.bf16.msra.mxu0 %v372
    %611 = vmatprep.subr.bf16.mxu0 0
    %612 = vmatpush1.bf16.msra.mxu0 %v373
    %613 = vmatprep.subr.bf16.mxu0 0
    %614 = vmatpush1.bf16.msra.mxu0 %v374
    %615 = vmatprep.subr.bf16.mxu0 0
    %616 = vmatpush1.bf16.msra.mxu0 %v375
    %617 = vmatprep.subr.bf16.mxu0 0
    %618 = vmatpush1.bf16.msra.mxu0 %v376
    %619 = vmatprep.subr.bf16.mxu0 0
    %620 = vmatpush1.bf16.msra.mxu0 %v377
    %621 = vmatprep.subr.bf16.mxu0 0
    %622 = vmatpush1.bf16.msra.mxu0 %v378
    %623 = vmatprep.subr.bf16.mxu0 0
    %624 = vmatpush1.bf16.msra.mxu0 0
    %625 = vmatprep.subr.bf16.mxu0 0
    %626 = vmatpush1.bf16.msra.mxu0 0
    %627 = vmatprep.subr.bf16.mxu0 0
    %628 = vmatpush1.bf16.msra.mxu0 0
    %629 = vmatprep.subr.bf16.mxu0 0
    %630 = vmatpush1.bf16.msra.mxu0 0
    %631 = vmatprep.subr.bf16.mxu0 0
    %632 = vmatpush1.bf16.msra.mxu0 0
    %633 = vmatprep.subr.bf16.mxu0 0
    %634 = vmatpush1.bf16.msra.mxu0 0
    %635 = vmatprep.subr.bf16.mxu0 0
    %636 = vmatpush1.bf16.msra.mxu0 0
    %637 = vmatprep.subr.bf16.mxu0 0
    %638 = vmatpush1.bf16.msra.mxu0 0
    %639 = vmatprep.mubr.bf16.mxu0 0
    %640 = vmatmul.mubr.bf16.gmra.mrb[0].mxu0 %v605
    %v641 = vpop.f32.mrb[0].mxu0
    %v642 = vadd.f32 %v309, %v641
    %v643 = vpop.f32.mrb[0].mxu0
    %v644 = vpop.f32.mrb[0].mxu0
    %v645 = vadd.f32 %v312, %v644
    %v646 = vpop.f32.mrb[0].mxu0
    %647 = vmatprep.mubr.bf16.mxu0 0
    %648 = vmatmul.mubr.bf16.gmra.mrb[0].mxu0 %v606
    %v649 = vpop.f32.mrb[0].mxu0
    %v650 = vadd.f32 %v317, %v649
    %v651 = vpop.f32.mrb[0].mxu0
    %v652 = vpop.f32.mrb[0].mxu0
    %v653 = vadd.f32 %v320, %v652
    %v654 = vpop.f32.mrb[0].mxu0
    %655 = vdwg.mxu0
    %v656 = vmax.f32 %v642, 0.0
    %v657 = vmax.f32 %v645, 0.0
    %v658 = vmax.f32 %v650, 0.0
    %v659 = vmax.f32 %v653, 0.0
    %v660 = vpack.c.bf16 %v657, %v656
    %v661 = vpack.c.bf16 %v659, %v658
    %662 = vmatprep.subr.bf16.mxu0 0
    %663 = vmatpush1.bf16.msra.mxu0 %v371
    %664 = vmatprep.subr.bf16.mxu0 0
    %665 = vmatpush1.bf16.msra.mxu0 %v372
    %666 = vmatprep.subr.bf16.mxu0 0
    %667 = vmatpush1.bf16.msra.mxu0 %v373
    %668 = vmatprep.subr.bf16.mxu0 0
    %669 = vmatpush1.bf16.msra.mxu0 %v374
    %670 = vmatprep.subr.bf16.mxu0 0
    %671 = vmatpush1.bf16.msra.mxu0 %v375
    %672 = vmatprep.subr.bf16.mxu0 0
    %673 = vmatpush1.bf16.msra.mxu0 %v376
    %674 = vmatprep.subr.bf16.mxu0 0
    %675 = vmatpush1.bf16.msra.mxu0 %v377
    %676 = vmatprep.subr.bf16.mxu0 0
    %677 = vmatpush1.bf16.msra.mxu0 %v378
    %678 = vmatprep.subr.bf16.mxu0 0
    %679 = vmatpush1.bf16.msra.mxu0 0
    %680 = vmatprep.subr.bf16.mxu0 0
    %681 = vmatpush1.bf16.msra.mxu0 0
    %682 = vmatprep.subr.bf16.mxu0 0
    %683 = vmatpush1.bf16.msra.mxu0 0
    %684 = vmatprep.subr.bf16.mxu0 0
    %685 = vmatpush1.bf16.msra.mxu0 0
    %686 = vmatprep.subr.bf16.mxu0 0
    %687 = vmatpush1.bf16.msra.mxu0 0
    %688 = vmatprep.subr.bf16.mxu0 0
    %689 = vmatpush1.bf16.msra.mxu0 0
    %690 = vmatprep.subr.bf16.mxu0 0
    %691 = vmatpush1.bf16.msra.mxu0 0
    %692 = vmatprep.subr.bf16.mxu0 0
    %693 = vmatpush1.bf16.msra.mxu0 0
    %694 = vmatprep.mubr.bf16.mxu0 0
    %695 = vmatmul.mubr.bf16.gmra.mrb[0].mxu0 %v660
    %v696 = vpop.f32.mrb[0].mxu0
    %v697 = vadd.f32 %v309, %v696
    %v698 = vpop.f32.mrb[0].mxu0
    %v699 = vpop.f32.mrb[0].mxu0
    %v700 = vadd.f32 %v312, %v699
    %v701 = vpop.f32.mrb[0].mxu0
    %702 = vmatprep.mubr.bf16.mxu0 0
    %703 = vmatmul.mubr.bf16.gmra.mrb[0].mxu0 %v661
    %v704 = vpop.f32.mrb[0].mxu0
    %v705 = vadd.f32 %v317, %v704
    %v706 = vpop.f32.mrb[0].mxu0
    %v707 = vpop.f32.mrb[0].mxu0
    %v708 = vadd.f32 %v320, %v707
    %v709 = vpop.f32.mrb[0].mxu0
    %710 = vdwg.mxu0
    %v711 = vmax.f32 %v697, 0.0
    %v712 = vmax.f32 %v700, 0.0
    %v713 = vmax.f32 %v705, 0.0
    %v714 = vmax.f32 %v708, 0.0
    %v715 = vpack.c.bf16 %v712, %v711
    %v716 = vpack.c.bf16 %v714, %v713
    %717 = vmatprep.subr.bf16.mxu0 0
    %718 = vmatpush1.bf16.msra.mxu0 %v371
    %719 = vmatprep.subr.bf16.mxu0 0
    %720 = vmatpush1.bf16.msra.mxu0 %v372
    %721 = vmatprep.subr.bf16.mxu0 0
    %722 = vmatpush1.bf16.msra.mxu0 %v373
    %723 = vmatprep.subr.bf16.mxu0 0
    %724 = vmatpush1.bf16.msra.mxu0 %v374
    %725 = vmatprep.subr.bf16.mxu0 0
    %726 = vmatpush1.bf16.msra.mxu0 %v375
    %727 = vmatprep.subr.bf16.mxu0 0
    %728 = vmatpush1.bf16.msra.mxu0 %v376
    %729 = vmatprep.subr.bf16.mxu0 0
    %730 = vmatpush1.bf16.msra.mxu0 %v377
    %731 = vmatprep.subr.bf16.mxu0 0
    %732 = vmatpush1.bf16.msra.mxu0 %v378
    %733 = vmatprep.subr.bf16.mxu0 0
    %734 = vmatpush1.bf16.msra.mxu0 0
    %735 = vmatprep.subr.bf16.mxu0 0
    %736 = vmatpush1.bf16.msra.mxu0 0
    %737 = vmatprep.subr.bf16.mxu0 0
    %738 = vmatpush1.bf16.msra.mxu0 0
    %739 = vmatprep.subr.bf16.mxu0 0
    %740 = vmatpush1.bf16.msra.mxu0 0
    %741 = vmatprep.subr.bf16.mxu0 0
    %742 = vmatpush1.bf16.msra.mxu0 0
    %743 = vmatprep.subr.bf16.mxu0 0
    %744 = vmatpush1.bf16.msra.mxu0 0
    %745 = vmatprep.subr.bf16.mxu0 0
    %746 = vmatpush1.bf16.msra.mxu0 0
    %747 = vmatprep.subr.bf16.mxu0 0
    %748 = vmatpush1.bf16.msra.mxu0 0
    %749 = vmatprep.mubr.bf16.mxu0 0
    %750 = vmatmul.mubr.bf16.gmra.mrb[0].mxu0 %v715
    %v751 = vpop.f32.mrb[0].mxu0
    %v752 = vadd.f32 %v309, %v751
    %v753 = vpop.f32.mrb[0].mxu0
    %v754 = vpop.f32.mrb[0].mxu0
    %v755 = vadd.f32 %v312, %v754
    %v756 = vpop.f32.mrb[0].mxu0
    %757 = vmatprep.mubr.bf16.mxu0 0
    %758 = vmatmul.mubr.bf16.gmra.mrb[0].mxu0 %v716
    %v759 = vpop.f32.mrb[0].mxu0
    %v760 = vadd.f32 %v317, %v759
    %v761 = vpop.f32.mrb[0].mxu0
    %v762 = vpop.f32.mrb[0].mxu0
    %v763 = vadd.f32 %v320, %v762
    %v764 = vpop.f32.mrb[0].mxu0
    %765 = vdwg.mxu0
    %v766 = vmax.f32 %v752, 0.0
    %v767 = vmax.f32 %v755, 0.0
    %v768 = vmax.f32 %v760, 0.0
    %v769 = vmax.f32 %v763, 0.0
    %v770 = vpack.c.bf16 %v767, %v766
    %v771 = vpack.c.bf16 %v769, %v768
    %772 = vmatprep.subr.bf16.mxu0 0
    %773 = vmatpush1.bf16.msra.mxu0 %v371
    %774 = vmatprep.subr.bf16.mxu0 0
    %775 = vmatpush1.bf16.msra.mxu0 %v372
    %776 = vmatprep.subr.bf16.mxu0 0
    %777 = vmatpush1.bf16.msra.mxu0 %v373
    %778 = vmatprep.subr.bf16.mxu0 0
    %779 = vmatpush1.bf16.msra.mxu0 %v374
    %780 = vmatprep.subr.bf16.mxu0 0
    %781 = vmatpush1.bf16.msra.mxu0 %v375
    %782 = vmatprep.subr.bf16.mxu0 0
    %783 = vmatpush1.bf16.msra.mxu0 %v376
    %784 = vmatprep.subr.bf16.mxu0 0
    %785 = vmatpush1.bf16.msra.mxu0 %v377
    %786 = vmatprep.subr.bf16.mxu0 0
    %787 = vmatpush1.bf16.msra.mxu0 %v378
    %788 = vmatprep.subr.bf16.mxu0 0
    %789 = vmatpush1.bf16.msra.mxu0 0
    %790 = vmatprep.subr.bf16.mxu0 0
    %791 = vmatpush1.bf16.msra.mxu0 0
    %792 = vmatprep.subr.bf16.mxu0 0
    %793 = vmatpush1.bf16.msra.mxu0 0
    %794 = vmatprep.subr.bf16.mxu0 0
    %795 = vmatpush1.bf16.msra.mxu0 0
    %796 = vmatprep.subr.bf16.mxu0 0
    %797 = vmatpush1.bf16.msra.mxu0 0
    %798 = vmatprep.subr.bf16.mxu0 0
    %799 = vmatpush1.bf16.msra.mxu0 0
    %800 = vmatprep.subr.bf16.mxu0 0
    %801 = vmatpush1.bf16.msra.mxu0 0
    %802 = vmatprep.subr.bf16.mxu0 0
    %803 = vmatpush1.bf16.msra.mxu0 0
    %804 = vmatprep.mubr.bf16.mxu0 0
    %805 = vmatmul.mubr.bf16.gmra.mrb[0].mxu0 %v770
    %v806 = vpop.f32.mrb[0].mxu0
    %v807 = vadd.f32 %v309, %v806
    %v808 = vpop.f32.mrb[0].mxu0
    %v809 = vpop.f32.mrb[0].mxu0
    %v810 = vadd.f32 %v312, %v809
    %v811 = vpop.f32.mrb[0].mxu0
    %812 = vmatprep.mubr.bf16.mxu0 0
    %813 = vmatmul.mubr.bf16.gmra.mrb[0].mxu0 %v771
    %v814 = vpop.f32.mrb[0].mxu0
    %v815 = vadd.f32 %v317, %v814
    %v816 = vpop.f32.mrb[0].mxu0
    %v817 = vpop.f32.mrb[0].mxu0
    %v818 = vadd.f32 %v320, %v817
    %v819 = vpop.f32.mrb[0].mxu0
    %820 = vdwg.mxu0
    %v821 = vmax.f32 %v807, 0.0
    %v822 = vmax.f32 %v810, 0.0
    %v823 = vmax.f32 %v815, 0.0
    %v824 = vmax.f32 %v818, 0.0
    %v825 = vpack.c.bf16 %v822, %v821
    %v826 = vpack.c.bf16 %v824, %v823
    %827 = vmatprep.subr.bf16.mxu0 0
    %828 = vmatpush1.bf16.msra.mxu0 %v371
    %829 = vmatprep.subr.bf16.mxu0 0
    %830 = vmatpush1.bf16.msra.mxu0 %v372
    %831 = vmatprep.subr.bf16.mxu0 0
    %832 = vmatpush1.bf16.msra.mxu0 %v373
    %833 = vmatprep.subr.bf16.mxu0 0
    %834 = vmatpush1.bf16.msra.mxu0 %v374
    %835 = vmatprep.subr.bf16.mxu0 0
    %836 = vmatpush1.bf16.msra.mxu0 %v375
    %837 = vmatprep.subr.bf16.mxu0 0
    %838 = vmatpush1.bf16.msra.mxu0 %v376
    %839 = vmatprep.subr.bf16.mxu0 0
    %840 = vmatpush1.bf16.msra.mxu0 %v377
    %841 = vmatprep.subr.bf16.mxu0 0
    %842 = vmatpush1.bf16.msra.mxu0 %v378
    %843 = vmatprep.subr.bf16.mxu0 0
    %844 = vmatpush1.bf16.msra.mxu0 0
    %845 = vmatprep.subr.bf16.mxu0 0
    %846 = vmatpush1.bf16.msra.mxu0 0
    %847 = vmatprep.subr.bf16.mxu0 0
    %848 = vmatpush1.bf16.msra.mxu0 0
    %849 = vmatprep.subr.bf16.mxu0 0
    %850 = vmatpush1.bf16.msra.mxu0 0
    %851 = vmatprep.subr.bf16.mxu0 0
    %852 = vmatpush1.bf16.msra.mxu0 0
    %853 = vmatprep.subr.bf16.mxu0 0
    %854 = vmatpush1.bf16.msra.mxu0 0
    %855 = vmatprep.subr.bf16.mxu0 0
    %856 = vmatpush1.bf16.msra.mxu0 0
    %857 = vmatprep.subr.bf16.mxu0 0
    %858 = vmatpush1.bf16.msra.mxu0 0
    %859 = vmatprep.mubr.bf16.mxu0 0
    %860 = vmatmul.mubr.bf16.gmra.mrb[0].mxu0 %v825
    %v861 = vpop.f32.mrb[0].mxu0
    %v862 = vadd.f32 %v309, %v861
    %v863 = vpop.f32.mrb[0].mxu0
    %v864 = vpop.f32.mrb[0].mxu0
    %v865 = vadd.f32 %v312, %v864
    %v866 = vpop.f32.mrb[0].mxu0
    %867 = vmatprep.mubr.bf16.mxu0 0
    %868 = vmatmul.mubr.bf16.gmra.mrb[0].mxu0 %v826
    %v869 = vpop.f32.mrb[0].mxu0
    %v870 = vadd.f32 %v317, %v869
    %v871 = vpop.f32.mrb[0].mxu0
    %v872 = vpop.f32.mrb[0].mxu0
    %v873 = vadd.f32 %v320, %v872
    %v874 = vpop.f32.mrb[0].mxu0
    %875 = vdwg.mxu0
    %v876 = vmax.f32 %v862, 0.0
    %v877 = vmax.f32 %v865, 0.0
    %v878 = vmax.f32 %v870, 0.0
    %v879 = vmax.f32 %v873, 0.0
    %v880 = vpack.c.bf16 %v877, %v876
    %v881 = vpack.c.bf16 %v879, %v878
    %882 = vmatprep.subr.bf16.mxu0 0
    %883 = vmatpush1.bf16.msra.mxu0 %v371
    %884 = vmatprep.subr.bf16.mxu0 0
    %885 = vmatpush1.bf16.msra.mxu0 %v372
    %886 = vmatprep.subr.bf16.mxu0 0
    %887 = vmatpush1.bf16.msra.mxu0 %v373
    %888 = vmatprep.subr.bf16.mxu0 0
    %889 = vmatpush1.bf16.msra.mxu0 %v374
    %890 = vmatprep.subr.bf16.mxu0 0
    %891 = vmatpush1.bf16.msra.mxu0 %v375
    %892 = vmatprep.subr.bf16.mxu0 0
    %893 = vmatpush1.bf16.msra.mxu0 %v376
    %894 = vmatprep.subr.bf16.mxu0 0
    %895 = vmatpush1.bf16.msra.mxu0 %v377
    %896 = vmatprep.subr.bf16.mxu0 0
    %897 = vmatpush1.bf16.msra.mxu0 %v378
    %898 = vmatprep.subr.bf16.mxu0 0
    %899 = vmatpush1.bf16.msra.mxu0 0
    %900 = vmatprep.subr.bf16.mxu0 0
    %901 = vmatpush1.bf16.msra.mxu0 0
    %902 = vmatprep.subr.bf16.mxu0 0
    %903 = vmatpush1.bf16.msra.mxu0 0
    %904 = vmatprep.subr.bf16.mxu0 0
    %905 = vmatpush1.bf16.msra.mxu0 0
    %906 = vmatprep.subr.bf16.mxu0 0
    %907 = vmatpush1.bf16.msra.mxu0 0
    %908 = vmatprep.subr.bf16.mxu0 0
    %909 = vmatpush1.bf16.msra.mxu0 0
    %910 = vmatprep.subr.bf16.mxu0 0
    %911 = vmatpush1.bf16.msra.mxu0 0
    %912 = vmatprep.subr.bf16.mxu0 0
    %913 = vmatpush1.bf16.msra.mxu0 0
    %914 = vmatprep.mubr.bf16.mxu0 0
    %915 = vmatmul.mubr.bf16.gmra.mrb[0].mxu0 %v880
    %v916 = vpop.f32.mrb[0].mxu0
    %v917 = vadd.f32 %v309, %v916
    %v918 = vpop.f32.mrb[0].mxu0
    %v919 = vpop.f32.mrb[0].mxu0
    %v920 = vadd.f32 %v312, %v919
    %v921 = vpop.f32.mrb[0].mxu0
    %922 = vmatprep.mubr.bf16.mxu0 0
    %923 = vmatmul.mubr.bf16.gmra.mrb[0].mxu0 %v881
    %v924 = vpop.f32.mrb[0].mxu0
    %v925 = vadd.f32 %v317, %v924
    %v926 = vpop.f32.mrb[0].mxu0
    %v927 = vpop.f32.mrb[0].mxu0
    %v928 = vadd.f32 %v320, %v927
    %v929 = vpop.f32.mrb[0].mxu0
    %930 = vdwg.mxu0
    %v931 = vmax.f32 %v917, 0.0
    %v932 = vmax.f32 %v920, 0.0
    %v933 = vmax.f32 %v925, 0.0
    %v934 = vmax.f32 %v928, 0.0
    %v935 = vpack.c.bf16 %v932, %v931
    %v936 = vpack.c.bf16 %v934, %v933
    %937 = vmatprep.subr.bf16.mxu0 0
    %938 = vmatpush1.bf16.msra.mxu0 %v371
    %939 = vmatprep.subr.bf16.mxu0 0
    %940 = vmatpush1.bf16.msra.mxu0 %v372
    %941 = vmatprep.subr.bf16.mxu0 0
    %942 = vmatpush1.bf16.msra.mxu0 %v373
    %943 = vmatprep.subr.bf16.mxu0 0
    %944 = vmatpush1.bf16.msra.mxu0 %v374
    %945 = vmatprep.subr.bf16.mxu0 0
    %946 = vmatpush1.bf16.msra.mxu0 %v375
    %947 = vmatprep.subr.bf16.mxu0 0
    %948 = vmatpush1.bf16.msra.mxu0 %v376
    %949 = vmatprep.subr.bf16.mxu0 0
    %950 = vmatpush1.bf16.msra.mxu0 %v377
    %951 = vmatprep.subr.bf16.mxu0 0
    %952 = vmatpush1.bf16.msra.mxu0 %v378
    %953 = vmatprep.subr.bf16.mxu0 0
    %954 = vmatpush1.bf16.msra.mxu0 0
    %955 = vmatprep.subr.bf16.mxu0 0
    %956 = vmatpush1.bf16.msra.mxu0 0
    %957 = vmatprep.subr.bf16.mxu0 0
    %958 = vmatpush1.bf16.msra.mxu0 0
    %959 = vmatprep.subr.bf16.mxu0 0
    %960 = vmatpush1.bf16.msra.mxu0 0
    %961 = vmatprep.subr.bf16.mxu0 0
    %962 = vmatpush1.bf16.msra.mxu0 0
    %963 = vmatprep.subr.bf16.mxu0 0
    %964 = vmatpush1.bf16.msra.mxu0 0
    %965 = vmatprep.subr.bf16.mxu0 0
    %966 = vmatpush1.bf16.msra.mxu0 0
    %967 = vmatprep.subr.bf16.mxu0 0
    %968 = vmatpush1.bf16.msra.mxu0 0
    %969 = vmatprep.mubr.bf16.mxu0 0
    %970 = vmatmul.mubr.bf16.gmra.mrb[0].mxu0 %v935
    %v971 = vpop.f32.mrb[0].mxu0
    %v972 = vadd.f32 %v309, %v971
    %v973 = vpop.f32.mrb[0].mxu0
    %v974 = vpop.f32.mrb[0].mxu0
    %v975 = vadd.f32 %v312, %v974
    %v976 = vpop.f32.mrb[0].mxu0
    %977 = vmatprep.mubr.bf16.mxu0 0
    %978 = vmatmul.mubr.bf16.gmra.mrb[0].mxu0 %v936
    %v979 = vpop.f32.mrb[0].mxu0
    %v980 = vadd.f32 %v317, %v979
    %v981 = vpop.f32.mrb[0].mxu0
    %v982 = vpop.f32.mrb[0].mxu0
    %v983 = vadd.f32 %v320, %v982
    %v984 = vpop.f32.mrb[0].mxu0
    %985 = vdwg.mxu0
    %v986 = vmax.f32 %v972, 0.0
    %v987 = vmax.f32 %v975, 0.0
    %v988 = vmax.f32 %v980, 0.0
    %v989 = vmax.f32 %v983, 0.0
    %v990 = vpack.c.bf16 %v987, %v986
    %v991 = vpack.c.bf16 %v989, %v988
    %992 = vmatprep.subr.bf16.mxu0 0
    %993 = vmatpush1.bf16.msra.mxu0 %v371
    %994 = vmatprep.subr.bf16.mxu0 0
    %995 = vmatpush1.bf16.msra.mxu0 %v372
    %996 = vmatprep.subr.bf16.mxu0 0
    %997 = vmatpush1.bf16.msra.mxu0 %v373
    %998 = vmatprep.subr.bf16.mxu0 0
    %999 = vmatpush1.bf16.msra.mxu0 %v374
    %1000 = vmatprep.subr.bf16.mxu0 0
    %1001 = vmatpush1.bf16.msra.mxu0 %v375
    %1002 = vmatprep.subr.bf16.mxu0 0
    %1003 = vmatpush1.bf16.msra.mxu0 %v376
    %1004 = vmatprep.subr.bf16.mxu0 0
    %1005 = vmatpush1.bf16.msra.mxu0 %v377
    %1006 = vmatprep.subr.bf16.mxu0 0
    %1007 = vmatpush1.bf16.msra.mxu0 %v378
    %1008 = vmatprep.subr.bf16.mxu0 0
    %1009 = vmatpush1.bf16.msra.mxu0 0
    %1010 = vmatprep.subr.bf16.mxu0 0
    %1011 = vmatpush1.bf16.msra.mxu0 0
    %1012 = vmatprep.subr.bf16.mxu0 0
    %1013 = vmatpush1.bf16.msra.mxu0 0
    %1014 = vmatprep.subr.bf16.mxu0 0
    %1015 = vmatpush1.bf16.msra.mxu0 0
    %1016 = vmatprep.subr.bf16.mxu0 0
    %1017 = vmatpush1.bf16.msra.mxu0 0
    %1018 = vmatprep.subr.bf16.mxu0 0
    %1019 = vmatpush1.bf16.msra.mxu0 0
    %1020 = vmatprep.subr.bf16.mxu0 0
    %1021 = vmatpush1.bf16.msra.mxu0 0
    %1022 = vmatprep.subr.bf16.mxu0 0
    %1023 = vmatpush1.bf16.msra.mxu0 0
    %1024 = vmatprep.mubr.bf16.mxu0 0
    %1025 = vmatmul.mubr.bf16.gmra.mrb[0].mxu0 %v990
    %v1026 = vpop.f32.mrb[0].mxu0
    %v1027 = vadd.f32 %v309, %v1026
    %v1028 = vpop.f32.mrb[0].mxu0
    %v1029 = vpop.f32.mrb[0].mxu0
    %v1030 = vadd.f32 %v312, %v1029
    %v1031 = vpop.f32.mrb[0].mxu0
    %1032 = vmatprep.mubr.bf16.mxu0 0
    %1033 = vmatmul.mubr.bf16.gmra.mrb[0].mxu0 %v991
    %v1034 = vpop.f32.mrb[0].mxu0
    %v1035 = vadd.f32 %v317, %v1034
    %v1036 = vpop.f32.mrb[0].mxu0
    %v1037 = vpop.f32.mrb[0].mxu0
    %v1038 = vadd.f32 %v320, %v1037
    %v1039 = vpop.f32.mrb[0].mxu0
    %1040 = vdwg.mxu0
    %v1041 = vmax.f32 %v1027, 0.0
    %v1042 = vmax.f32 %v1030, 0.0
    %v1043 = vmax.f32 %v1035, 0.0
    %v1044 = vmax.f32 %v1038, 0.0
    %v1045 = vpack.c.bf16 %v1042, %v1041
    %v1046 = vpack.c.bf16 %v1044, %v1043
    %1047 = vmatprep.subr.bf16.mxu0 0
    %1048 = vmatpush1.bf16.msra.mxu0 %v371
    %1049 = vmatprep.subr.bf16.mxu0 0
    %1050 = vmatpush1.bf16.msra.mxu0 %v372
    %1051 = vmatprep.subr.bf16.mxu0 0
    %1052 = vmatpush1.bf16.msra.mxu0 %v373
    %1053 = vmatprep.subr.bf16.mxu0 0
    %1054 = vmatpush1.bf16.msra.mxu0 %v374
    %1055 = vmatprep.subr.bf16.mxu0 0
    %1056 = vmatpush1.bf16.msra.mxu0 %v375
    %1057 = vmatprep.subr.bf16.mxu0 0
    %1058 = vmatpush1.bf16.msra.mxu0 %v376
    %1059 = vmatprep.subr.bf16.mxu0 0
    %1060 = vmatpush1.bf16.msra.mxu0 %v377
    %1061 = vmatprep.subr.bf16.mxu0 0
    %1062 = vmatpush1.bf16.msra.mxu0 %v378
    %1063 = vmatprep.subr.bf16.mxu0 0
    %1064 = vmatpush1.bf16.msra.mxu0 0
    %1065 = vmatprep.subr.bf16.mxu0 0
    %1066 = vmatpush1.bf16.msra.mxu0 0
    %1067 = vmatprep.subr.bf16.mxu0 0
    %1068 = vmatpush1.bf16.msra.mxu0 0
    %1069 = vmatprep.subr.bf16.mxu0 0
    %1070 = vmatpush1.bf16.msra.mxu0 0
    %1071 = vmatprep.subr.bf16.mxu0 0
    %1072 = vmatpush1.bf16.msra.mxu0 0
    %1073 = vmatprep.subr.bf16.mxu0 0
    %1074 = vmatpush1.bf16.msra.mxu0 0
    %1075 = vmatprep.subr.bf16.mxu0 0
    %1076 = vmatpush1.bf16.msra.mxu0 0
    %1077 = vmatprep.subr.bf16.mxu0 0
    %1078 = vmatpush1.bf16.msra.mxu0 0
    %1079 = vmatprep.mubr.bf16.mxu0 0
    %1080 = vmatmul.mubr.bf16.gmra.mrb[0].mxu0 %v1045
    %v1081 = vpop.f32.mrb[0].mxu0
    %v1082 = vadd.f32 %v309, %v1081
    %v1083 = vpop.f32.mrb[0].mxu0
    %v1084 = vpop.f32.mrb[0].mxu0
    %v1085 = vadd.f32 %v312, %v1084
    %v1086 = vpop.f32.mrb[0].mxu0
    %1087 = vmatprep.mubr.bf16.mxu0 0
    %1088 = vmatmul.mubr.bf16.gmra.mrb[0].mxu0 %v1046
    %v1089 = vpop.f32.mrb[0].mxu0
    %v1090 = vadd.f32 %v317, %v1089
    %v1091 = vpop.f32.mrb[0].mxu0
    %v1092 = vpop.f32.mrb[0].mxu0
    %v1093 = vadd.f32 %v320, %v1092
    %v1094 = vpop.f32.mrb[0].mxu0
    %1095 = vdwg.mxu0
    %v1096 = vmax.f32 %v1082, 0.0
    %v1097 = vmax.f32 %v1085, 0.0
    %v1098 = vmax.f32 %v1090, 0.0
    %v1099 = vmax.f32 %v1093, 0.0
    %v1100 = vpack.c.bf16 %v1097, %v1096
    %v1101 = vpack.c.bf16 %v1099, %v1098
    %1102 = vmatprep.subr.bf16.mxu0 0
    %1103 = vmatpush1.bf16.msra.mxu0 %v371
    %1104 = vmatprep.subr.bf16.mxu0 0
    %1105 = vmatpush1.bf16.msra.mxu0 %v372
    %1106 = vmatprep.subr.bf16.mxu0 0
    %1107 = vmatpush1.bf16.msra.mxu0 %v373
    %1108 = vmatprep.subr.bf16.mxu0 0
    %1109 = vmatpush1.bf16.msra.mxu0 %v374
    %1110 = vmatprep.subr.bf16.mxu0 0
    %1111 = vmatpush1.bf16.msra.mxu0 %v375
    %1112 = vmatprep.subr.bf16.mxu0 0
    %1113 = vmatpush1.bf16.msra.mxu0 %v376
    %1114 = vmatprep.subr.bf16.mxu0 0
    %1115 = vmatpush1.bf16.msra.mxu0 %v377
    %1116 = vmatprep.subr.bf16.mxu0 0
    %1117 = vmatpush1.bf16.msra.mxu0 %v378
    %1118 = vmatprep.subr.bf16.mxu0 0
    %1119 = vmatpush1.bf16.msra.mxu0 0
    %1120 = vmatprep.subr.bf16.mxu0 0
    %1121 = vmatpush1.bf16.msra.mxu0 0
    %1122 = vmatprep.subr.bf16.mxu0 0
    %1123 = vmatpush1.bf16.msra.mxu0 0
    %1124 = vmatprep.subr.bf16.mxu0 0
    %1125 = vmatpush1.bf16.msra.mxu0 0
    %1126 = vmatprep.subr.bf16.mxu0 0
    %1127 = vmatpush1.bf16.msra.mxu0 0
    %1128 = vmatprep.subr.bf16.mxu0 0
    %1129 = vmatpush1.bf16.msra.mxu0 0
    %1130 = vmatprep.subr.bf16.mxu0 0
    %1131 = vmatpush1.bf16.msra.mxu0 0
    %1132 = vmatprep.subr.bf16.mxu0 0
    %1133 = vmatpush1.bf16.msra.mxu0 0
    %1134 = vmatprep.mubr.bf16.mxu0 0
    %1135 = vmatmul.mubr.bf16.gmra.mrb[0].mxu0 %v1100
    %v1136 = vpop.f32.mrb[0].mxu0
    %v1137 = vadd.f32 %v309, %v1136
    %v1138 = vpop.f32.mrb[0].mxu0
    %v1139 = vpop.f32.mrb[0].mxu0
    %v1140 = vadd.f32 %v312, %v1139
    %v1141 = vpop.f32.mrb[0].mxu0
    %1142 = vmatprep.mubr.bf16.mxu0 0
    %1143 = vmatmul.mubr.bf16.gmra.mrb[0].mxu0 %v1101
    %v1144 = vpop.f32.mrb[0].mxu0
    %v1145 = vadd.f32 %v317, %v1144
    %v1146 = vpop.f32.mrb[0].mxu0
    %v1147 = vpop.f32.mrb[0].mxu0
    %v1148 = vadd.f32 %v320, %v1147
    %v1149 = vpop.f32.mrb[0].mxu0
    %1150 = vdwg.mxu0
    %v1151 = vmax.f32 %v1137, 0.0
    %v1152 = vmax.f32 %v1140, 0.0
    %v1153 = vmax.f32 %v1145, 0.0
    %v1154 = vmax.f32 %v1148, 0.0
    %v1155 = vpack.c.bf16 %v1152, %v1151
    %v1156 = vpack.c.bf16 %v1154, %v1153
    %1157 = vmatprep.subr.bf16.mxu0 0
    %1158 = vmatpush1.bf16.msra.mxu0 %v371
    %1159 = vmatprep.subr.bf16.mxu0 0
    %1160 = vmatpush1.bf16.msra.mxu0 %v372
    %1161 = vmatprep.subr.bf16.mxu0 0
    %1162 = vmatpush1.bf16.msra.mxu0 %v373
    %1163 = vmatprep.subr.bf16.mxu0 0
    %1164 = vmatpush1.bf16.msra.mxu0 %v374
    %1165 = vmatprep.subr.bf16.mxu0 0
    %1166 = vmatpush1.bf16.msra.mxu0 %v375
    %1167 = vmatprep.subr.bf16.mxu0 0
    %1168 = vmatpush1.bf16.msra.mxu0 %v376
    %1169 = vmatprep.subr.bf16.mxu0 0
    %1170 = vmatpush1.bf16.msra.mxu0 %v377
    %1171 = vmatprep.subr.bf16.mxu0 0
    %1172 = vmatpush1.bf16.msra.mxu0 %v378
    %1173 = vmatprep.subr.bf16.mxu0 0
    %1174 = vmatpush1.bf16.msra.mxu0 0
    %1175 = vmatprep.subr.bf16.mxu0 0
    %1176 = vmatpush1.bf16.msra.mxu0 0
    %1177 = vmatprep.subr.bf16.mxu0 0
    %1178 = vmatpush1.bf16.msra.mxu0 0
    %1179 = vmatprep.subr.bf16.mxu0 0
    %1180 = vmatpush1.bf16.msra.mxu0 0
    %1181 = vmatprep.subr.bf16.mxu0 0
    %1182 = vmatpush1.bf16.msra.mxu0 0
    %1183 = vmatprep.subr.bf16.mxu0 0
    %1184 = vmatpush1.bf16.msra.mxu0 0
    %1185 = vmatprep.subr.bf16.mxu0 0
    %1186 = vmatpush1.bf16.msra.mxu0 0
    %1187 = vmatprep.subr.bf16.mxu0 0
    %1188 = vmatpush1.bf16.msra.mxu0 0
    %1189 = vmatprep.mubr.bf16.mxu0 0
    %1190 = vmatmul.mubr.bf16.gmra.mrb[0].mxu0 %v1155
    %v1191 = vpop.f32.mrb[0].mxu0
    %v1192 = vadd.f32 %v309, %v1191
    %v1193 = vpop.f32.mrb[0].mxu0
    %v1194 = vpop.f32.mrb[0].mxu0
    %v1195 = vadd.f32 %v312, %v1194
    %v1196 = vpop.f32.mrb[0].mxu0
    %1197 = vmatprep.mubr.bf16.mxu0 0
    %1198 = vmatmul.mubr.bf16.gmra.mrb[0].mxu0 %v1156
    %v1199 = vpop.f32.mrb[0].mxu0
    %v1200 = vadd.f32 %v317, %v1199
    %v1201 = vpop.f32.mrb[0].mxu0
    %v1202 = vpop.f32.mrb[0].mxu0
    %v1203 = vadd.f32 %v320, %v1202
    %v1204 = vpop.f32.mrb[0].mxu0
    %1205 = vdwg.mxu0
    %v1206 = vmax.f32 %v1192, 0.0
    %v1207 = vmax.f32 %v1195, 0.0
    %v1208 = vmax.f32 %v1200, 0.0
    %v1209 = vmax.f32 %v1203, 0.0
    %v1210 = vpack.c.bf16 %v1207, %v1206
    %v1211 = vpack.c.bf16 %v1209, %v1208
    %1212 = vmatprep.subr.bf16.mxu0 0
    %1213 = vmatpush1.bf16.msra.mxu0 %v371
    %1214 = vmatprep.subr.bf16.mxu0 0
    %1215 = vmatpush1.bf16.msra.mxu0 %v372
    %1216 = vmatprep.subr.bf16.mxu0 0
    %1217 = vmatpush1.bf16.msra.mxu0 %v373
    %1218 = vmatprep.subr.bf16.mxu0 0
    %1219 = vmatpush1.bf16.msra.mxu0 %v374
    %1220 = vmatprep.subr.bf16.mxu0 0
    %1221 = vmatpush1.bf16.msra.mxu0 %v375
    %1222 = vmatprep.subr.bf16.mxu0 0
    %1223 = vmatpush1.bf16.msra.mxu0 %v376
    %1224 = vmatprep.subr.bf16.mxu0 0
    %1225 = vmatpush1.bf16.msra.mxu0 %v377
    %1226 = vmatprep.subr.bf16.mxu0 0
    %1227 = vmatpush1.bf16.msra.mxu0 %v378
    %1228 = vmatprep.subr.bf16.mxu0 0
    %1229 = vmatpush1.bf16.msra.mxu0 0
    %1230 = vmatprep.subr.bf16.mxu0 0
    %1231 = vmatpush1.bf16.msra.mxu0 0
    %1232 = vmatprep.subr.bf16.mxu0 0
    %1233 = vmatpush1.bf16.msra.mxu0 0
    %1234 = vmatprep.subr.bf16.mxu0 0
    %1235 = vmatpush1.bf16.msra.mxu0 0
    %1236 = vmatprep.subr.bf16.mxu0 0
    %1237 = vmatpush1.bf16.msra.mxu0 0
    %1238 = vmatprep.subr.bf16.mxu0 0
    %1239 = vmatpush1.bf16.msra.mxu0 0
    %1240 = vmatprep.subr.bf16.mxu0 0
    %1241 = vmatpush1.bf16.msra.mxu0 0
    %1242 = vmatprep.subr.bf16.mxu0 0
    %1243 = vmatpush1.bf16.msra.mxu0 0
    %1244 = vmatprep.mubr.bf16.mxu0 0
    %1245 = vmatmul.mubr.bf16.gmra.mrb[0].mxu0 %v1210
    %v1246 = vpop.f32.mrb[0].mxu0
    %v1247 = vadd.f32 %v309, %v1246
    %v1248 = vpop.f32.mrb[0].mxu0
    %v1249 = vpop.f32.mrb[0].mxu0
    %v1250 = vadd.f32 %v312, %v1249
    %v1251 = vpop.f32.mrb[0].mxu0
    %1252 = vmatprep.mubr.bf16.mxu0 0
    %1253 = vmatmul.mubr.bf16.gmra.mrb[0].mxu0 %v1211
    %v1254 = vpop.f32.mrb[0].mxu0
    %v1255 = vadd.f32 %v317, %v1254
    %v1256 = vpop.f32.mrb[0].mxu0
    %v1257 = vpop.f32.mrb[0].mxu0
    %v1258 = vadd.f32 %v320, %v1257
    %v1259 = vpop.f32.mrb[0].mxu0
    %1260 = vdwg.mxu0
    %v1261 = vmax.f32 %v1247, 0.0
    %v1262 = vmax.f32 %v1250, 0.0
    %v1263 = vmax.f32 %v1255, 0.0
    %v1264 = vmax.f32 %v1258, 0.0
    %v1265 = vpack.c.bf16 %v1262, %v1261
    %v1266 = vpack.c.bf16 %v1264, %v1263
    %v1267 = vunpack.c.l.bf16 %v1265
    %v1268 = vunpack.c.h.bf16 %v1265
    %v1269 = vunpack.c.l.bf16 %v1266
    %v1270 = vunpack.c.h.bf16 %v1266
    %v1271 = vmul.f32 %v1267, 0.5
    %v1272 = vmul.f32 %v1268, 0.5
    %v1273 = vmul.f32 %v1269, 0.5
    %v1274 = vmul.f32 %v1270, 0.5
    %v1275 = vmul.f32 %v1267, 0.70710677
    %v1276 = vmul.f32 %v1268, 0.70710677
    %v1277 = vmul.f32 %v1269, 0.70710677
    %v1278 = vmul.f32 %v1270, 0.70710677
    %v1279 = verf.f32.pop %v1275
    %v1280 = verf.f32.pop %v1276
    %v1281 = verf.f32.pop %v1277
    %v1282 = verf.f32.pop %v1278
    %v1283 = vadd.f32 %v1279, 1.0
    %v1284 = vadd.f32 %v1280, 1.0
    %v1285 = vadd.f32 %v1281, 1.0
    %v1286 = vadd.f32 %v1282, 1.0
    %v1287 = vmul.f32 %v1271, %v1283
    %v1288 = vmul.f32 %v1272, %v1284
    %v1289 = vmul.f32 %v1273, %v1285
    %v1290 = vmul.f32 %v1274, %v1286
    %v1291 = vadd.f32 %v119, %v1287
    %v1292 = vadd.f32 %v122, %v1288
    %v1293 = vadd.f32 %v127, %v1289
    %v1294 = vadd.f32 %v130, %v1290
    %v1295 = vld [vmem:[%s6] sm:$0xf]
    %v1296 = vld [vmem:[%s6 + $0x4] sm:$0xf]
    %v1297 = vpack.c.bf16 %v1292, %v1291
    %v1298 = vpack.c.bf16 %v1294, %v1293
    %v1299 = vld [vmem:[%s7] sm:$0xff]
    %v1300 = vld [vmem:[%s7 + $0x8] sm:$0xff]
    %1302 = vset.pattern.permute.xlu0 0
    %1303 = vperm.xlu0 %1302, %v1299
    %v1304 = vpop.permute.xlu0 %1303
    %1307 = vset.pattern.permute.xlu0 0
    %1308 = vperm.xlu0 %1307, %v1300
    %v1309 = vpop.permute.xlu0 %1308
    %v1313 = vunpack.c.l.b16 %v1295
    %v1314 = vunpack.c.l.b16 %v1296
    %v1315 = vpack.c.b16 %v1314, %v1313
    %v1317 = vsel %vm163, %v1315, 0
    %1319 = vmatprep.subr.bf16.mxu0 0
    %1320 = vmatpush1.bf16.msra.mxu0 %v1297
    %1321 = vmatprep.subr.bf16.mxu0 0
    %1322 = vmatpush1.bf16.msra.mxu0 %v1298
    %1323 = vmatprep.subr.bf16.mxu0 0
    %1324 = vmatpush1.bf16.msra.mxu0 0
    %1325 = vmatprep.subr.bf16.mxu0 0
    %1326 = vmatpush1.bf16.msra.mxu0 0
    %1327 = vmatprep.subr.bf16.mxu0 0
    %1328 = vmatpush1.bf16.msra.mxu0 0
    %1329 = vmatprep.subr.bf16.mxu0 0
    %1330 = vmatpush1.bf16.msra.mxu0 0
    %1331 = vmatprep.subr.bf16.mxu0 0
    %1332 = vmatpush1.bf16.msra.mxu0 0
    %1333 = vmatprep.subr.bf16.mxu0 0
    %1334 = vmatpush1.bf16.msra.mxu0 0
    %1335 = vmatprep.subr.bf16.mxu0 0
    %1336 = vmatpush1.bf16.msra.mxu0 0
    %1337 = vmatprep.subr.bf16.mxu0 0
    %1338 = vmatpush1.bf16.msra.mxu0 0
    %1339 = vmatprep.subr.bf16.mxu0 0
    %1340 = vmatpush1.bf16.msra.mxu0 0
    %1341 = vmatprep.subr.bf16.mxu0 0
    %1342 = vmatpush1.bf16.msra.mxu0 0
    %1343 = vmatprep.subr.bf16.mxu0 0
    %1344 = vmatpush1.bf16.msra.mxu0 0
    %1345 = vmatprep.subr.bf16.mxu0 0
    %1346 = vmatpush1.bf16.msra.mxu0 0
    %1347 = vmatprep.subr.bf16.mxu0 0
    %1348 = vmatpush1.bf16.msra.mxu0 0
    %1349 = vmatprep.subr.bf16.mxu0 0
    %1350 = vmatpush1.bf16.msra.mxu0 0
    %1351 = vmatprep.mubr.bf16.mxu0 0
    %1352 = vmatmul.mubr.bf16.gmra.mrb[0].mxu0 %v1317
    %v1353 = vpop.f32.mrb[0].mxu0
    %v1354 = vadd.f32 %v1304, %v1353
    %v1355 = vpop.f32.mrb[0].mxu0
    %v1356 = vpop.f32.mrb[0].mxu0
    %v1357 = vadd.f32 %v1309, %v1356
    %v1358 = vpop.f32.mrb[0].mxu0
    %1359 = vdwg.mxu0
    %1360 = vst [vmem:[#allocation2] sm:$0xff] %v1354
    %1361 = vst [vmem:[#allocation2 + $0x8] sm:$0xff] %v1357
    // Predicated region
    $region34: #{tpu_custom_call.1} parent=1 // pred_check
      _
    $region35: #{tpu_custom_call.1} parent=1 // pred_check_branch
      %1363 = sbr.rel (0) target = $region37
    $region36: #{tpu_custom_call.1} parent=1 // pred_region
      %s1365 = ssub.s32 256, 256
      %1366 = vsyncadd [#allocation3], %s1365
      %s1367 = sshll.u32 [#allocation2], 4
      %s1368 = int_to_ptr.vmem [resolvable:$true] %s1367
      %1373 = dma.vmem_to_hbm [thread:$0]  %s1368, 256, %s8, [#allocation3], 128, 128, 8
    $region37: #{tpu_custom_call.1} parent=1 // pred_fallthru
      _
    // Predicated region
    $region38: #{tpu_custom_call.1} parent=1 // pred_check
      _
    $region39: #{tpu_custom_call.1} parent=1 // pred_check_branch
      %1375 = sbr.rel (0) target = $region41
    $region40: #{tpu_custom_call.1} parent=1 // pred_region
      %1376 = dma.done [#allocation3], 256
    $region41: #{tpu_custom_call.1} parent=1 // pred_fallthru
      _
    %1377 = vsyncpa [#allocation3], 1

</llo_original>
